<compile_context>
chip_gen: v5e
topology: v5e:2x2
jax: 0.10.0
libtpu: 0.0.40
codegen_flags: <defaults>
</compile_context>

<pallas_src>
import functools

import jax
import jax.numpy as jnp
from jax import lax
from jax.experimental import pallas as pl
from jax.experimental.pallas import tpu as pltpu

NEG_BIG = -1e30  # -inf substitute for padded logits (keeps exp()/max() exact)


# ----------------------------- fused Pallas kernel --------------------------

def _fused_cnn_kernel(x_ref, w1_ref, b1_ref, w2_ref, b2_ref,
                      wfc1_ref, bfc1_ref, wfc2_ref, bfc2_ref,
                      wfc3_ref, bfc3_ref, o_ref, *, tb):
    f32 = jnp.float32

    # ---- conv1 + bias + ReLU + 2x2 max-pool : ONE matmul ----
    # x_ref: (28*tb, 140); rows ordered (row-parity, pooled-row r', image b),
    #        K = 5 height taps x 28 input columns (host-built).
    # w1:    (140, 256); lanes [0:112]=even output cols, [128:240]=odd
    #        (channel-major, pooled-col), zero-padded lane groups.
    y1 = jnp.dot(x_ref[...], w1_ref[...], preferred_element_type=f32)  # (28tb,256)
    m1 = jnp.maximum(y1[:, :128], y1[:, 128:])              # width pool (lane-aligned)
    r1 = jnp.maximum(m1 + b1_ref[...], 0.0)
    p1 = jnp.maximum(r1[:14 * tb, :], r1[14 * tb:, :])      # height pool (parity halves)
    # p1: (14*tb, 128) rows (pooled-row r', image b); lanes (c*14 + col), 112 valid.

    # ---- conv2 + bias + ReLU + 2x2 max-pool : K-concat of 3 taps, ONE matmul ----
    pcat = jnp.concatenate(
        [p1[0:12 * tb, :], p1[tb:13 * tb, :], p1[2 * tb:14 * tb, :]], axis=1)
    # pcat: (12*tb, 384), rows ordered (conv2 row r, image b).
    y2 = jnp.dot(pcat, w2_ref[...], preferred_element_type=f32)        # (12tb,256)
    m2 = jnp.maximum(y2[:, :128], y2[:, 128:])
    r2 = jnp.maximum(m2 + b2_ref[...], 0.0)                            # (12tb,128)

    # pool2 height + NCHW flatten: 6 aligned slice-maxima lane-concatenated.
    h0 = jnp.concatenate(
        [jnp.maximum(r2[(2 * u) * tb:(2 * u + 1) * tb, :],
                     r2[(2 * u + 1) * tb:(2 * u + 2) * tb, :])
         for u in range(6)],
        axis=1)                                                         # (tb, 768)

    # ---- fc1 -> fc2 -> fc3 + log_softmax (all lane-dense / 128-padded) ----
    h1 = jnp.maximum(jnp.dot(h0, wfc1_ref[...], preferred_element_type=f32)
                     + bfc1_ref[...], 0.0)
    # TODO(synk): Dropout2d is identity at inference; not applied here.
    h2 = jnp.maximum(jnp.dot(h1, wfc2_ref[...], preferred_element_type=f32)
                     + bfc2_ref[...], 0.0)
    z = jnp.dot(h2, wfc3_ref[...], preferred_element_type=f32) + bfc3_ref[...]
    m = jnp.max(z, axis=-1, keepdims=True)          # pad lanes are ~-1e30 -> ignored
    s = z - m
    lse = jnp.log(jnp.sum(jnp.exp(s), axis=-1, keepdims=True))
    o_ref[...] = (s - lse).astype(o_ref.dtype)      # dense (tb,128) store


# ----------------------- host-side weight transforms ------------------------
# One-time, weight-only: fold im2col, pooling parity, and the NCHW flatten
# into the weight layout so the kernel never permutes activations.

def _conv1_weight(w1):
    """w1: (8,1,5,5) OIHW -> (140, 256) fused even/odd Toeplitz weight."""
    w = w1[:, 0]                                    # (o, kh, kw)
    p = jnp.arange(28)[:, None]                     # input col
    j = jnp.arange(28)[None, :]                     # output col ('same' pad = 2)
    dj = p - j + 2
    valid = ((dj >= 0) & (dj < 5)).astype(w.dtype)
    t = jnp.clip(dj, 0, 4)
    wr = w[:, :, t] * valid[None, None]             # (o, kh, p, j)
    wr = jnp.transpose(wr, (1, 2, 0, 3))            # (kh, p, o, j)
    we = wr[..., 0::2].reshape(5, 28, 112)          # even output cols
    wo = wr[..., 1::2].reshape(5, 28, 112)          # odd output cols
    wcat = jnp.concatenate([jnp.pad(we, ((0, 0), (0, 0), (0, 16))),
                            jnp.pad(wo, ((0, 0), (0, 0), (0, 16)))], axis=-1)
    return wcat.reshape(140, 256)                   # K = kh*28 + p


def _conv2_weight(w2):
    """w2: (16,8,3,3) -> (384, 256) fused even/odd Toeplitz weight."""
    s = jnp.arange(14)[:, None]                     # input (pooled) col
    v = jnp.arange(12)[None, :]                     # output col
    dv = s - v
    valid = ((dv >= 0) & (dv < 3)).astype(w2.dtype)
    t = jnp.clip(dv, 0, 2)
    wr = w2[:, :, :, t] * valid[None, None, None]   # (o, c, kh, s, v)
    wr = jnp.transpose(wr, (2, 1, 3, 0, 4))         # (kh, c, s, o, v)
    wr = wr.reshape(3, 112, 16, 12)
    we = wr[..., 0::2].reshape(3, 112, 96)
    wo = wr[..., 1::2].reshape(3, 112, 96)
    wcat = jnp.concatenate([jnp.pad(we, ((0, 0), (0, 16), (0, 32))),
                            jnp.pad(wo, ((0, 0), (0, 16), (0, 32)))], axis=-1)
    return wcat.reshape(384, 256)                   # K = kh*128 + (c*14 + s)


def _fc1_weight(wfc1):
    """wfc1: (600, 576) PyTorch (out,in), flatten order (c,h,w) -> (768, 600)."""
    w = wfc1.reshape(600, 16, 6, 6)                 # (m, o, u, v)
    w = jnp.transpose(w, (2, 1, 3, 0))              # (u, o, v, m)
    w = w.reshape(6, 96, 600)
    return jnp.pad(w, ((0, 0), (0, 32), (0, 0))).reshape(768, 600)


def _round_up(n, m):
    return ((n + m - 1) // m) * m


# ----------------------------- model -----------------------------------------

def init_params(seed=42):
    key = jax.random.PRNGKey(seed)
    ks = jax.random.split(key, 10)

    def w_init(k, shape, fan_in):
        return jax.random.normal(k, shape, jnp.float32) / jnp.sqrt(fan_in)

    def b_init(k, shape):
        return 0.01 * jax.random.normal(k, shape, jnp.float32)

    return {
        # PyTorch layouts: Conv2d weight (O, C, kh, kw); Linear weight (out, in)
        "w_conv1": w_init(ks[0], (8, 1, 5, 5), 1 * 5 * 5),
        "b_conv1": b_init(ks[1], (8,)),
        "w_conv2": w_init(ks[2], (16, 8, 3, 3), 8 * 3 * 3),
        "b_conv2": b_init(ks[3], (16,)),
        "w_fc1": w_init(ks[4], (600, 16 * 6 * 6), 16 * 6 * 6),
        "b_fc1": b_init(ks[5], (600,)),
        "w_fc2": w_init(ks[6], (120, 600), 600),
        "b_fc2": b_init(ks[7], (120,)),
        "w_fc3": w_init(ks[8], (10, 120), 120),
        "b_fc3": b_init(ks[9], (10,)),
    }


def cnn_forward(params, x):
    """x: any shape that reshapes to (-1, 1, 28, 28) NCHW. Returns (B, 10) log-probs."""
    x = x.reshape(-1, 1, 28, 28).astype(jnp.float32)
    B = x.shape[0]

    # Batch tile: as large as possible (<=128) while keeping >=2 grid steps
    # whenever the batch allows it (so v7x's two TensorCores both get work).
    tb = max(8, min(128, _round_up((B + 1) // 2, 8)))
    bp = _round_up(B, tb)
    nblk = bp // tb

    # --- input prep: height-pad, K-concat the 5 conv1 taps, and order the
    # rows (block, row-parity, pooled-row, image) so every pool in the kernel
    # is an aligned slice max.
    xh = jnp.pad(x[:, 0], ((0, bp - B), (2, 2), (0, 0)))               # (bp, 32, 28)
    taps = jnp.stack([xh[:, di:di + 28, :] for di in range(5)], axis=2)  # (bp,28,5,28)
    taps = taps.reshape(nblk, tb, 14, 2, 140)       # conv row o = 2*r' + parity
    taps = jnp.transpose(taps, (0, 3, 2, 1, 4))     # (blk, parity, r', b, K)
    xcat = taps.reshape(nblk * 28 * tb, 140)

    # --- weights / biases in kernel layout (128-lane padded where useful)
    w1c = _conv1_weight(params["w_conv1"])                              # (140, 256)
    b1c = jnp.pad(jnp.repeat(params["b_conv1"], 14), (0, 16))[None, :]  # (1, 128)
    w2c = _conv2_weight(params["w_conv2"])                              # (384, 256)
    b2c = jnp.pad(jnp.repeat(params["b_conv2"], 6), (0, 32))[None, :]   # (1, 128)
    wfc1c = _fc1_weight(params["w_fc1"])                                # (768, 600)
    bfc1c = params["b_fc1"][None, :]                                    # (1, 600)
    wfc2c = jnp.pad(params["w_fc2"].T, ((0, 0), (0, 8)))                # (600, 128)
    bfc2c = jnp.pad(params["b_fc2"], (0, 8))[None, :]                   # (1, 128)
    wfc3c = jnp.pad(params["w_fc3"].T, ((0, 8), (0, 118)))              # (128, 128)
    bfc3c = jnp.concatenate(
        [params["b_fc3"], jnp.full((118,), NEG_BIG, jnp.float32)])[None, :]  # (1, 128)

    consts = (w1c, b1c, w2c, b2c, wfc1c, bfc1c, wfc2c, bfc2c, wfc3c, bfc3c)

    def const_spec(a):
        nd = a.ndim
        return pl.BlockSpec(a.shape, lambda i, _nd=nd: (0,) * _nd)

    out = pl.pallas_call(
        functools.partial(_fused_cnn_kernel, tb=tb),
        grid=(nblk,),
        out_shape=jax.ShapeDtypeStruct((bp, 128), jnp.float32),
        in_specs=[pl.BlockSpec((28 * tb, 140), lambda i: (i, 0))]
                 + [const_spec(a) for a in consts],
        out_specs=pl.BlockSpec((tb, 128), lambda i: (i, 0)),
        compiler_params=pltpu.CompilerParams(
            dimension_semantics=("parallel",),
            vmem_limit_bytes=48 * 1024 * 1024),
    )(xcat, *consts)
    return out[:B, :10]


# ----------------------------- pure-JAX reference ----------------------------

def cnn_forward_ref(params, x):
    x = x.reshape(-1, 1, 28, 28).astype(jnp.float32)
    dn = ("NCHW", "OIHW", "NCHW")
    hp = lax.Precision.HIGHEST
    y = lax.conv_general_dilated(x, params["w_conv1"], (1, 1), ((2, 2), (2, 2)),
                                 dimension_numbers=dn, precision=hp)
    y = jax.nn.relu(y + params["b_conv1"][None, :, None, None])
    y = lax.reduce_window(y, -jnp.inf, lax.max, (1, 1, 2, 2), (1, 1, 2, 2), "VALID")
    y = lax.conv_general_dilated(y, params["w_conv2"], (1, 1), ((0, 0), (0, 0)),
                                 dimension_numbers=dn, precision=hp)
    y = jax.nn.relu(y + params["b_conv2"][None, :, None, None])
    y = lax.reduce_window(y, -jnp.inf, lax.max, (1, 1, 2, 2), (1, 1, 2, 2), "VALID")
    flat = y.reshape(y.shape[0], -1)
    h1 = jax.nn.relu(jnp.dot(flat, params["w_fc1"].T, precision=hp) + params["b_fc1"])
    h2 = jax.nn.relu(jnp.dot(h1, params["w_fc2"].T, precision=hp) + params["b_fc2"])
    z = jnp.dot(h2, params["w_fc3"].T, precision=hp) + params["b_fc3"]
    return jax.nn.log_softmax(z, axis=-1)


if __name__ == "__main__":
    params = init_params(seed=42)
    fwd = jax.jit(cnn_forward)

    # batch=2 (spec's small shape) plus a multi-tile batch to exercise the grid.
    for batch in (2, 24):
        x = jax.random.normal(jax.random.PRNGKey(0), (batch, 1, 28, 28), jnp.float32)
        out = jax.block_until_ready(fwd(params, x))
        assert out.shape == (batch, 10), out.shape

        # log_softmax sanity: rows must (exp-)sum to ~1
        row_sums = jnp.exp(out).sum(axis=1)
        assert bool(jnp.all(jnp.abs(row_sums - 1.0) < 1e-4)), row_sums

        # numerical check against a pure-JAX reference of the PyTorch module
        ref = cnn_forward_ref(params, x)
        err = float(jnp.max(jnp.abs(out - ref)))
        assert err < 2e-3, f"batch={batch}: mismatch vs reference: {err}"

    print("KERNEL_OK")
</pallas_src>

<mosaic_0001>
module attributes {stable_mosaic.version = 11 : i64} {
  func.func @_fused_cnn_kernel(%arg0: i32, %arg1: memref<224x140xf32, #tpu.memory_space<vmem>>, %arg2: memref<140x256xf32, #tpu.memory_space<vmem>>, %arg3: memref<1x128xf32, #tpu.memory_space<vmem>>, %arg4: memref<384x256xf32, #tpu.memory_space<vmem>>, %arg5: memref<1x128xf32, #tpu.memory_space<vmem>>, %arg6: memref<768x600xf32, #tpu.memory_space<vmem>>, %arg7: memref<1x600xf32, #tpu.memory_space<vmem>>, %arg8: memref<600x128xf32, #tpu.memory_space<vmem>>, %arg9: memref<1x128xf32, #tpu.memory_space<vmem>>, %arg10: memref<128x128xf32, #tpu.memory_space<vmem>>, %arg11: memref<1x128xf32, #tpu.memory_space<vmem>>, %arg12: memref<8x128xf32, #tpu.memory_space<vmem>>) attributes {dimension_semantics = [#tpu.dimension_semantics<parallel>], iteration_bounds = array<i64: 1>, scalar_prefetch = 0 : i64, scratch_operands = 0 : i64, tpu.core_type = #tpu.core_type<tc>, window_params = [{transform_indices = @transform_0, window_bounds = array<i64: 224, 140>}, {pipeline_mode = #tpu.pipeline_mode<synchronous>, transform_indices = @transform_1, window_bounds = array<i64: 140, 256>}, {pipeline_mode = #tpu.pipeline_mode<synchronous>, transform_indices = @transform_2, window_bounds = array<i64: 1, 128>}, {pipeline_mode = #tpu.pipeline_mode<synchronous>, transform_indices = @transform_3, window_bounds = array<i64: 384, 256>}, {pipeline_mode = #tpu.pipeline_mode<synchronous>, transform_indices = @transform_4, window_bounds = array<i64: 1, 128>}, {pipeline_mode = #tpu.pipeline_mode<synchronous>, transform_indices = @transform_5, window_bounds = array<i64: 768, 600>}, {pipeline_mode = #tpu.pipeline_mode<synchronous>, transform_indices = @transform_6, window_bounds = array<i64: 1, 600>}, {pipeline_mode = #tpu.pipeline_mode<synchronous>, transform_indices = @transform_7, window_bounds = array<i64: 600, 128>}, {pipeline_mode = #tpu.pipeline_mode<synchronous>, transform_indices = @transform_8, window_bounds = array<i64: 1, 128>}, {pipeline_mode = #tpu.pipeline_mode<synchronous>, transform_indices = @transform_9, window_bounds = array<i64: 128, 128>}, {pipeline_mode = #tpu.pipeline_mode<synchronous>, transform_indices = @transform_10, window_bounds = array<i64: 1, 128>}, {transform_indices = @transform_11, window_bounds = array<i64: 8, 128>}]} {
    %c0 = arith.constant 0 : index
    %c0_0 = arith.constant 0 : index
    %0 = vector.load %arg1[%c0, %c0_0] : memref<224x140xf32, #tpu.memory_space<vmem>>, vector<224x140xf32>
    %c0_1 = arith.constant 0 : index
    %c0_2 = arith.constant 0 : index
    %1 = vector.load %arg2[%c0_1, %c0_2] : memref<140x256xf32, #tpu.memory_space<vmem>>, vector<140x256xf32>
    %cst = arith.constant dense<0.000000e+00> : vector<224x256xf32>
    %2 = tpu.matmul %0, %1, %cst {dimension_numbers = #tpu.dot_dimension_numbers<[1], [0], [0], [1], [0, 0, 1, 1], [], []>} : vector<224x140xf32>, vector<140x256xf32>, vector<224x256xf32> -> vector<224x256xf32>
    %3 = vector.extract_strided_slice %2 {offsets = [0, 0], sizes = [224, 128], strides = [1, 1]} : vector<224x256xf32> to vector<224x128xf32>
    %4 = vector.extract_strided_slice %2 {offsets = [0, 128], sizes = [224, 128], strides = [1, 1]} : vector<224x256xf32> to vector<224x128xf32>
    %5 = arith.maximumf %3, %4 : vector<224x128xf32>
    %c0_3 = arith.constant 0 : index
    %c0_4 = arith.constant 0 : index
    %6 = vector.load %arg3[%c0_3, %c0_4] : memref<1x128xf32, #tpu.memory_space<vmem>>, vector<1x128xf32>
    %7 = vector.broadcast %6 : vector<1x128xf32> to vector<224x128xf32>
    %8 = arith.addf %5, %7 : vector<224x128xf32>
    %cst_5 = arith.constant 0.000000e+00 : f32
    %9 = vector.broadcast %cst_5 : f32 to vector<224x128xf32>
    %10 = arith.maximumf %8, %9 : vector<224x128xf32>
    %11 = vector.extract_strided_slice %10 {offsets = [0, 0], sizes = [112, 128], strides = [1, 1]} : vector<224x128xf32> to vector<112x128xf32>
    %12 = vector.extract_strided_slice %10 {offsets = [112, 0], sizes = [112, 128], strides = [1, 1]} : vector<224x128xf32> to vector<112x128xf32>
    %13 = arith.maximumf %11, %12 : vector<112x128xf32>
    %14 = vector.extract_strided_slice %13 {offsets = [0, 0], sizes = [96, 128], strides = [1, 1]} : vector<112x128xf32> to vector<96x128xf32>
    %15 = vector.extract_strided_slice %13 {offsets = [8, 0], sizes = [96, 128], strides = [1, 1]} : vector<112x128xf32> to vector<96x128xf32>
    %16 = vector.extract_strided_slice %13 {offsets = [16, 0], sizes = [96, 128], strides = [1, 1]} : vector<112x128xf32> to vector<96x128xf32>
    %17 = tpu.concatenate %14, %15, %16 in 1 : vector<96x128xf32>, vector<96x128xf32>, vector<96x128xf32> -> vector<96x384xf32>
    %c0_6 = arith.constant 0 : index
    %c0_7 = arith.constant 0 : index
    %18 = vector.load %arg4[%c0_6, %c0_7] : memref<384x256xf32, #tpu.memory_space<vmem>>, vector<384x256xf32>
    %cst_8 = arith.constant dense<0.000000e+00> : vector<96x256xf32>
    %19 = tpu.matmul %17, %18, %cst_8 {dimension_numbers = #tpu.dot_dimension_numbers<[1], [0], [0], [1], [0, 0, 1, 1], [], []>} : vector<96x384xf32>, vector<384x256xf32>, vector<96x256xf32> -> vector<96x256xf32>
    %20 = vector.extract_strided_slice %19 {offsets = [0, 0], sizes = [96, 128], strides = [1, 1]} : vector<96x256xf32> to vector<96x128xf32>
    %21 = vector.extract_strided_slice %19 {offsets = [0, 128], sizes = [96, 128], strides = [1, 1]} : vector<96x256xf32> to vector<96x128xf32>
    %22 = arith.maximumf %20, %21 : vector<96x128xf32>
    %c0_9 = arith.constant 0 : index
    %c0_10 = arith.constant 0 : index
    %23 = vector.load %arg5[%c0_9, %c0_10] : memref<1x128xf32, #tpu.memory_space<vmem>>, vector<1x128xf32>
    %24 = vector.broadcast %23 : vector<1x128xf32> to vector<96x128xf32>
    %25 = arith.addf %22, %24 : vector<96x128xf32>
    %cst_11 = arith.constant 0.000000e+00 : f32
    %26 = vector.broadcast %cst_11 : f32 to vector<96x128xf32>
    %27 = arith.maximumf %25, %26 : vector<96x128xf32>
    %28 = vector.extract_strided_slice %27 {offsets = [0, 0], sizes = [8, 128], strides = [1, 1]} : vector<96x128xf32> to vector<8x128xf32>
    %29 = vector.extract_strided_slice %27 {offsets = [8, 0], sizes = [8, 128], strides = [1, 1]} : vector<96x128xf32> to vector<8x128xf32>
    %30 = arith.maximumf %28, %29 : vector<8x128xf32>
    %31 = vector.extract_strided_slice %27 {offsets = [16, 0], sizes = [8, 128], strides = [1, 1]} : vector<96x128xf32> to vector<8x128xf32>
    %32 = vector.extract_strided_slice %27 {offsets = [24, 0], sizes = [8, 128], strides = [1, 1]} : vector<96x128xf32> to vector<8x128xf32>
    %33 = arith.maximumf %31, %32 : vector<8x128xf32>
    %34 = vector.extract_strided_slice %27 {offsets = [32, 0], sizes = [8, 128], strides = [1, 1]} : vector<96x128xf32> to vector<8x128xf32>
    %35 = vector.extract_strided_slice %27 {offsets = [40, 0], sizes = [8, 128], strides = [1, 1]} : vector<96x128xf32> to vector<8x128xf32>
    %36 = arith.maximumf %34, %35 : vector<8x128xf32>
    %37 = vector.extract_strided_slice %27 {offsets = [48, 0], sizes = [8, 128], strides = [1, 1]} : vector<96x128xf32> to vector<8x128xf32>
    %38 = vector.extract_strided_slice %27 {offsets = [56, 0], sizes = [8, 128], strides = [1, 1]} : vector<96x128xf32> to vector<8x128xf32>
    %39 = arith.maximumf %37, %38 : vector<8x128xf32>
    %40 = vector.extract_strided_slice %27 {offsets = [64, 0], sizes = [8, 128], strides = [1, 1]} : vector<96x128xf32> to vector<8x128xf32>
    %41 = vector.extract_strided_slice %27 {offsets = [72, 0], sizes = [8, 128], strides = [1, 1]} : vector<96x128xf32> to vector<8x128xf32>
    %42 = arith.maximumf %40, %41 : vector<8x128xf32>
    %43 = vector.extract_strided_slice %27 {offsets = [80, 0], sizes = [8, 128], strides = [1, 1]} : vector<96x128xf32> to vector<8x128xf32>
    %44 = vector.extract_strided_slice %27 {offsets = [88, 0], sizes = [8, 128], strides = [1, 1]} : vector<96x128xf32> to vector<8x128xf32>
    %45 = arith.maximumf %43, %44 : vector<8x128xf32>
    %46 = tpu.concatenate %30, %33, %36, %39, %42, %45 in 1 : vector<8x128xf32>, vector<8x128xf32>, vector<8x128xf32>, vector<8x128xf32>, vector<8x128xf32>, vector<8x128xf32> -> vector<8x768xf32>
    %c0_12 = arith.constant 0 : index
    %c0_13 = arith.constant 0 : index
    %47 = vector.load %arg6[%c0_12, %c0_13] : memref<768x600xf32, #tpu.memory_space<vmem>>, vector<768x600xf32>
    %cst_14 = arith.constant dense<0.000000e+00> : vector<8x600xf32>
    %48 = tpu.matmul %46, %47, %cst_14 {dimension_numbers = #tpu.dot_dimension_numbers<[1], [0], [0], [1], [0, 0, 1, 1], [], []>} : vector<8x768xf32>, vector<768x600xf32>, vector<8x600xf32> -> vector<8x600xf32>
    %c0_15 = arith.constant 0 : index
    %c0_16 = arith.constant 0 : index
    %49 = vector.load %arg7[%c0_15, %c0_16] : memref<1x600xf32, #tpu.memory_space<vmem>>, vector<1x600xf32>
    %50 = vector.broadcast %49 : vector<1x600xf32> to vector<8x600xf32>
    %51 = arith.addf %48, %50 : vector<8x600xf32>
    %cst_17 = arith.constant 0.000000e+00 : f32
    %52 = vector.broadcast %cst_17 : f32 to vector<8x600xf32>
    %53 = arith.maximumf %51, %52 : vector<8x600xf32>
    %c0_18 = arith.constant 0 : index
    %c0_19 = arith.constant 0 : index
    %54 = vector.load %arg8[%c0_18, %c0_19] : memref<600x128xf32, #tpu.memory_space<vmem>>, vector<600x128xf32>
    %cst_20 = arith.constant dense<0.000000e+00> : vector<8x128xf32>
    %55 = tpu.matmul %53, %54, %cst_20 {dimension_numbers = #tpu.dot_dimension_numbers<[1], [0], [0], [1], [0, 0, 1, 1], [], []>} : vector<8x600xf32>, vector<600x128xf32>, vector<8x128xf32> -> vector<8x128xf32>
    %c0_21 = arith.constant 0 : index
    %c0_22 = arith.constant 0 : index
    %56 = vector.load %arg9[%c0_21, %c0_22] : memref<1x128xf32, #tpu.memory_space<vmem>>, vector<1x128xf32>
    %57 = vector.broadcast %56 : vector<1x128xf32> to vector<8x128xf32>
    %58 = arith.addf %55, %57 : vector<8x128xf32>
    %cst_23 = arith.constant 0.000000e+00 : f32
    %59 = vector.broadcast %cst_23 : f32 to vector<8x128xf32>
    %60 = arith.maximumf %58, %59 : vector<8x128xf32>
    %c0_24 = arith.constant 0 : index
    %c0_25 = arith.constant 0 : index
    %61 = vector.load %arg10[%c0_24, %c0_25] : memref<128x128xf32, #tpu.memory_space<vmem>>, vector<128x128xf32>
    %cst_26 = arith.constant dense<0.000000e+00> : vector<8x128xf32>
    %62 = tpu.matmul %60, %61, %cst_26 {dimension_numbers = #tpu.dot_dimension_numbers<[1], [0], [0], [1], [0, 0, 1, 1], [], []>} : vector<8x128xf32>, vector<128x128xf32>, vector<8x128xf32> -> vector<8x128xf32>
    %c0_27 = arith.constant 0 : index
    %c0_28 = arith.constant 0 : index
    %63 = vector.load %arg11[%c0_27, %c0_28] : memref<1x128xf32, #tpu.memory_space<vmem>>, vector<1x128xf32>
    %64 = vector.broadcast %63 : vector<1x128xf32> to vector<8x128xf32>
    %65 = arith.addf %62, %64 : vector<8x128xf32>
    %cst_29 = arith.constant dense<0xFF800000> : vector<8xf32>
    %66 = vector.multi_reduction <maximumf>, %65, %cst_29 [1] : vector<8x128xf32> to vector<8xf32>
    %67 = vector.shape_cast %66 : vector<8xf32> to vector<8x1xf32>
    %68 = vector.broadcast %67 : vector<8x1xf32> to vector<8x128xf32>
    %69 = arith.subf %65, %68 : vector<8x128xf32>
    %70 = math.exp %69 : vector<8x128xf32>
    %cst_30 = arith.constant dense<0.000000e+00> : vector<8xf32>
    %71 = vector.multi_reduction <add>, %70, %cst_30 [1] : vector<8x128xf32> to vector<8xf32>
    %72 = vector.shape_cast %71 : vector<8xf32> to vector<8x1xf32>
    %73 = math.log %72 : vector<8x1xf32>
    %74 = vector.broadcast %73 : vector<8x1xf32> to vector<8x128xf32>
    %75 = arith.subf %69, %74 : vector<8x128xf32>
    %c0_31 = arith.constant 0 : index
    %c0_32 = arith.constant 0 : index
    %76 = vector.load %arg12[%c0_31, %c0_32] : memref<8x128xf32, #tpu.memory_space<vmem>>, vector<8x128xf32>
    tpu.vector_store %arg12[%c0_31, %c0_32], %75 {strides = array<i32>} : memref<8x128xf32, #tpu.memory_space<vmem>>, vector<8x128xf32>,
    return
  }
  func.func @transform_0(%arg0: i32) -> (i32, i32) {
    %c0_i32 = arith.constant 0 : i32
    %c0_i32_0 = arith.constant 0 : i32
    return %arg0, %c0_i32 : i32, i32
  }
  func.func @transform_1(%arg0: i32) -> (i32, i32) {
    %c0_i32 = arith.constant 0 : i32
    %c0_i32_0 = arith.constant 0 : i32
    %c0_i32_1 = arith.constant 0 : i32
    return %c0_i32, %c0_i32_0 : i32, i32
  }
  func.func @transform_2(%arg0: i32) -> (i32, i32) {
    %c0_i32 = arith.constant 0 : i32
    %c0_i32_0 = arith.constant 0 : i32
    %c0_i32_1 = arith.constant 0 : i32
    return %c0_i32, %c0_i32_0 : i32, i32
  }
  func.func @transform_3(%arg0: i32) -> (i32, i32) {
    %c0_i32 = arith.constant 0 : i32
    %c0_i32_0 = arith.constant 0 : i32
    %c0_i32_1 = arith.constant 0 : i32
    return %c0_i32, %c0_i32_0 : i32, i32
  }
  func.func @transform_4(%arg0: i32) -> (i32, i32) {
    %c0_i32 = arith.constant 0 : i32
    %c0_i32_0 = arith.constant 0 : i32
    %c0_i32_1 = arith.constant 0 : i32
    return %c0_i32, %c0_i32_0 : i32, i32
  }
  func.func @transform_5(%arg0: i32) -> (i32, i32) {
    %c0_i32 = arith.constant 0 : i32
    %c0_i32_0 = arith.constant 0 : i32
    %c0_i32_1 = arith.constant 0 : i32
    return %c0_i32, %c0_i32_0 : i32, i32
  }
  func.func @transform_6(%arg0: i32) -> (i32, i32) {
    %c0_i32 = arith.constant 0 : i32
    %c0_i32_0 = arith.constant 0 : i32
    %c0_i32_1 = arith.constant 0 : i32
    return %c0_i32, %c0_i32_0 : i32, i32
  }
  func.func @transform_7(%arg0: i32) -> (i32, i32) {
    %c0_i32 = arith.constant 0 : i32
    %c0_i32_0 = arith.constant 0 : i32
    %c0_i32_1 = arith.constant 0 : i32
    return %c0_i32, %c0_i32_0 : i32, i32
  }
  func.func @transform_8(%arg0: i32) -> (i32, i32) {
    %c0_i32 = arith.constant 0 : i32
    %c0_i32_0 = arith.constant 0 : i32
    %c0_i32_1 = arith.constant 0 : i32
    return %c0_i32, %c0_i32_0 : i32, i32
  }
  func.func @transform_9(%arg0: i32) -> (i32, i32) {
    %c0_i32 = arith.constant 0 : i32
    %c0_i32_0 = arith.constant 0 : i32
    %c0_i32_1 = arith.constant 0 : i32
    return %c0_i32, %c0_i32_0 : i32, i32
  }
  func.func @transform_10(%arg0: i32) -> (i32, i32) {
    %c0_i32 = arith.constant 0 : i32
    %c0_i32_0 = arith.constant 0 : i32
    %c0_i32_1 = arith.constant 0 : i32
    return %c0_i32, %c0_i32_0 : i32, i32
  }
  func.func @transform_11(%arg0: i32) -> (i32, i32) {
    %c0_i32 = arith.constant 0 : i32
    %c0_i32_0 = arith.constant 0 : i32
    return %arg0, %c0_i32 : i32, i32
  }
}

</mosaic_0001>

<llo_original>
// kernel: cnn_forward.1
$region0: #{cnn_forward.1}
  #allocation0 [shape = 'u32[]', space=smem, size = 0x4, offset = 0x4, fixed_abs, tag = 'smem constant byte address 0x4 - core index']
  #allocation1 [shape = 'u32[72,128]{1,0:T(1,128)}', space=vmem, size = 0x9000, scoped, tag = 'internal scratch']
  %s0 = inlined_call_operand.vmem [shape: f32[224,140], index: 0, kind: input, shape index: {}]
  %s1 = inlined_call_operand.vmem [shape: f32[140,256], index: 1, kind: input, shape index: {}]
  %s2 = inlined_call_operand.vmem [shape: f32[1,128], index: 2, kind: input, shape index: {}]
  %s3 = inlined_call_operand.vmem [shape: f32[384,256], index: 3, kind: input, shape index: {}]
  %s4 = inlined_call_operand.vmem [shape: f32[1,128], index: 4, kind: input, shape index: {}]
  %s5 = inlined_call_operand.vmem [shape: f32[768,600], index: 5, kind: input, shape index: {}]
  %s6 = inlined_call_operand.vmem [shape: f32[1,600], index: 6, kind: input, shape index: {}]
  %s7 = inlined_call_operand.vmem [shape: f32[600,128], index: 7, kind: input, shape index: {}]
  %s8 = inlined_call_operand.vmem [shape: f32[1,128], index: 8, kind: input, shape index: {}]
  %s9 = inlined_call_operand.vmem [shape: f32[128,128], index: 9, kind: input, shape index: {}]
  %s10 = inlined_call_operand.vmem [shape: f32[1,128], index: 10, kind: input, shape index: {}]
  %s11 = inlined_call_operand.vmem [shape: f32[8,128], index: 11, kind: output, shape index: {}]
  %s12 = sld [smem:[#allocation0]]
  $region54: #{cnn_forward.1} parent=0
    _
  %s14 = ssub.s32 1, %s12
  %s15 = scalar_select 0, %s14, %s12
  // Predicated region
  $region2: #{cnn_forward.1} parent=0 // pred_check
    _
  $region3: #{cnn_forward.1} parent=0 // pred_check_branch
    %17 = sbr.rel (0) target = $region5
  $region4: #{cnn_forward.1} parent=0 // pred_region
    _
  $region5: #{cnn_forward.1} parent=0 // pred_fallthru
    _
  // Predicated region
  $region6: #{cnn_forward.1} parent=0 // pred_check
    _
  $region7: #{cnn_forward.1} parent=0 // pred_check_branch
    %19 = sbr.rel (0) target = $region9
  $region8: #{cnn_forward.1} parent=0 // pred_region
    _
  $region9: #{cnn_forward.1} parent=0 // pred_fallthru
    _
  // Predicated region
  $region10: #{cnn_forward.1} parent=0 // pred_check
    _
  $region11: #{cnn_forward.1} parent=0 // pred_check_branch
    %21 = sbr.rel (0) target = $region13
  $region12: #{cnn_forward.1} parent=0 // pred_region
    _
  $region13: #{cnn_forward.1} parent=0 // pred_fallthru
    _
  // Predicated region
  $region14: #{cnn_forward.1} parent=0 // pred_check
    _
  $region15: #{cnn_forward.1} parent=0 // pred_check_branch
    %23 = sbr.rel (0) target = $region17
  $region16: #{cnn_forward.1} parent=0 // pred_region
    _
  $region17: #{cnn_forward.1} parent=0 // pred_fallthru
    _
  // Predicated region
  $region18: #{cnn_forward.1} parent=0 // pred_check
    _
  $region19: #{cnn_forward.1} parent=0 // pred_check_branch
    %25 = sbr.rel (0) target = $region21
  $region20: #{cnn_forward.1} parent=0 // pred_region
    _
  $region21: #{cnn_forward.1} parent=0 // pred_fallthru
    _
  // Predicated region
  $region22: #{cnn_forward.1} parent=0 // pred_check
    _
  $region23: #{cnn_forward.1} parent=0 // pred_check_branch
    %27 = sbr.rel (0) target = $region25
  $region24: #{cnn_forward.1} parent=0 // pred_region
    _
  $region25: #{cnn_forward.1} parent=0 // pred_fallthru
    _
  // Predicated region
  $region26: #{cnn_forward.1} parent=0 // pred_check
    _
  $region27: #{cnn_forward.1} parent=0 // pred_check_branch
    %29 = sbr.rel (0) target = $region29
  $region28: #{cnn_forward.1} parent=0 // pred_region
    _
  $region29: #{cnn_forward.1} parent=0 // pred_fallthru
    _
  // Predicated region
  $region30: #{cnn_forward.1} parent=0 // pred_check
    _
  $region31: #{cnn_forward.1} parent=0 // pred_check_branch
    %31 = sbr.rel (0) target = $region33
  $region32: #{cnn_forward.1} parent=0 // pred_region
    _
  $region33: #{cnn_forward.1} parent=0 // pred_fallthru
    _
  // Predicated region
  $region34: #{cnn_forward.1} parent=0 // pred_check
    _
  $region35: #{cnn_forward.1} parent=0 // pred_check_branch
    %33 = sbr.rel (0) target = $region37
  $region36: #{cnn_forward.1} parent=0 // pred_region
    _
  $region37: #{cnn_forward.1} parent=0 // pred_fallthru
    _
  // Predicated region
  $region38: #{cnn_forward.1} parent=0 // pred_check
    _
  $region39: #{cnn_forward.1} parent=0 // pred_check_branch
    %35 = sbr.rel (0) target = $region41
  $region40: #{cnn_forward.1} parent=0 // pred_region
    _
  $region41: #{cnn_forward.1} parent=0 // pred_fallthru
    _
  // Predicated region
  $region42: #{cnn_forward.1} parent=0 // pred_check
    _
  $region43: #{cnn_forward.1} parent=0 // pred_check_branch
    %37 = sbr.rel (0) target = $region45
  $region44: #{cnn_forward.1} parent=0 // pred_region
    _
  $region45: #{cnn_forward.1} parent=0 // pred_fallthru
    _
  %v38 = vld [vmem:[%s0] sm:$0xff]
  %v39 = vld [vmem:[%s0 + $0x8] sm:$0xff]
  %v40 = vld [vmem:[%s0 + $0x10] sm:$0xff]
  %v41 = vld [vmem:[%s0 + $0x18] sm:$0xff]
  %v42 = vld [vmem:[%s0 + $0x20] sm:$0xff]
  %v43 = vld [vmem:[%s0 + $0x28] sm:$0xff]
  %v44 = vld [vmem:[%s0 + $0x30] sm:$0xff]
  %v45 = vld [vmem:[%s0 + $0x38] sm:$0xff]
  %v46 = vld [vmem:[%s0 + $0x40] sm:$0xff]
  %v47 = vld [vmem:[%s0 + $0x48] sm:$0xff]
  %v48 = vld [vmem:[%s0 + $0x50] sm:$0xff]
  %v49 = vld [vmem:[%s0 + $0x58] sm:$0xff]
  %v50 = vld [vmem:[%s0 + $0x60] sm:$0xff]
  %v51 = vld [vmem:[%s0 + $0x68] sm:$0xff]
  %v52 = vld [vmem:[%s0 + $0x70] sm:$0xff]
  %v53 = vld [vmem:[%s0 + $0x78] sm:$0xff]
  %v54 = vld [vmem:[%s0 + $0x80] sm:$0xff]
  %v55 = vld [vmem:[%s0 + $0x88] sm:$0xff]
  %v56 = vld [vmem:[%s0 + $0x90] sm:$0xff]
  %v57 = vld [vmem:[%s0 + $0x98] sm:$0xff]
  %v58 = vld [vmem:[%s0 + $0xa0] sm:$0xff]
  %v59 = vld [vmem:[%s0 + $0xa8] sm:$0xff]
  %v60 = vld [vmem:[%s0 + $0xb0] sm:$0xff]
  %v61 = vld [vmem:[%s0 + $0xb8] sm:$0xff]
  %v62 = vld [vmem:[%s0 + $0xc0] sm:$0xff]
  %v63 = vld [vmem:[%s0 + $0xc8] sm:$0xff]
  %v64 = vld [vmem:[%s0 + $0xd0] sm:$0xff]
  %v65 = vld [vmem:[%s0 + $0xd8] sm:$0xff]
  %v66 = vld [vmem:[%s0 + $0xe0] sm:$0xff]
  %v67 = vld [vmem:[%s0 + $0xe8] sm:$0xff]
  %v68 = vld [vmem:[%s0 + $0xf0] sm:$0xff]
  %v69 = vld [vmem:[%s0 + $0xf8] sm:$0xff]
  %v70 = vld [vmem:[%s0 + $0x100] sm:$0xff]
  %v71 = vld [vmem:[%s0 + $0x108] sm:$0xff]
  %v72 = vld [vmem:[%s0 + $0x110] sm:$0xff]
  %v73 = vld [vmem:[%s0 + $0x118] sm:$0xff]
  %v74 = vld [vmem:[%s0 + $0x120] sm:$0xff]
  %v75 = vld [vmem:[%s0 + $0x128] sm:$0xff]
  %v76 = vld [vmem:[%s0 + $0x130] sm:$0xff]
  %v77 = vld [vmem:[%s0 + $0x138] sm:$0xff]
  %v78 = vld [vmem:[%s0 + $0x140] sm:$0xff]
  %v79 = vld [vmem:[%s0 + $0x148] sm:$0xff]
  %v80 = vld [vmem:[%s0 + $0x150] sm:$0xff]
  %v81 = vld [vmem:[%s0 + $0x158] sm:$0xff]
  %v82 = vld [vmem:[%s0 + $0x160] sm:$0xff]
  %v83 = vld [vmem:[%s0 + $0x168] sm:$0xff]
  %v84 = vld [vmem:[%s0 + $0x170] sm:$0xff]
  %v85 = vld [vmem:[%s0 + $0x178] sm:$0xff]
  %v86 = vld [vmem:[%s0 + $0x180] sm:$0xff]
  %v87 = vld [vmem:[%s0 + $0x188] sm:$0xff]
  %v88 = vld [vmem:[%s0 + $0x190] sm:$0xff]
  %v89 = vld [vmem:[%s0 + $0x198] sm:$0xff]
  %v90 = vld [vmem:[%s0 + $0x1a0] sm:$0xff]
  %v91 = vld [vmem:[%s0 + $0x1a8] sm:$0xff]
  %v92 = vld [vmem:[%s0 + $0x1b0] sm:$0xff]
  %v93 = vld [vmem:[%s0 + $0x1b8] sm:$0xff]
  %v94 = vld [vmem:[%s1] sm:$0xff]
  %v95 = vld [vmem:[%s1 + $0x8] sm:$0xff]
  %v96 = vld [vmem:[%s1 + $0x10] sm:$0xff]
  %v97 = vld [vmem:[%s1 + $0x18] sm:$0xff]
  %v98 = vld [vmem:[%s1 + $0x20] sm:$0xff]
  %v99 = vld [vmem:[%s1 + $0x28] sm:$0xff]
  %v100 = vld [vmem:[%s1 + $0x30] sm:$0xff]
  %v101 = vld [vmem:[%s1 + $0x38] sm:$0xff]
  %v102 = vld [vmem:[%s1 + $0x40] sm:$0xff]
  %v103 = vld [vmem:[%s1 + $0x48] sm:$0xff]
  %v104 = vld [vmem:[%s1 + $0x50] sm:$0xff]
  %v105 = vld [vmem:[%s1 + $0x58] sm:$0xff]
  %v106 = vld [vmem:[%s1 + $0x60] sm:$0xff]
  %v107 = vld [vmem:[%s1 + $0x68] sm:$0xff]
  %v108 = vld [vmem:[%s1 + $0x70] sm:$0xff]
  %v109 = vld [vmem:[%s1 + $0x78] sm:$0xff]
  %v110 = vld [vmem:[%s1 + $0x80] sm:$0xff]
  %v111 = vld [vmem:[%s1 + $0x88] sm:$0xff]
  %v112 = vld [vmem:[%s1 + $0x90] sm:$0xff]
  %v113 = vld [vmem:[%s1 + $0x98] sm:$0xff]
  %v114 = vld [vmem:[%s1 + $0xa0] sm:$0xff]
  %v115 = vld [vmem:[%s1 + $0xa8] sm:$0xff]
  %v116 = vld [vmem:[%s1 + $0xb0] sm:$0xff]
  %v117 = vld [vmem:[%s1 + $0xb8] sm:$0xff]
  %v118 = vld [vmem:[%s1 + $0xc0] sm:$0xff]
  %v119 = vld [vmem:[%s1 + $0xc8] sm:$0xff]
  %v120 = vld [vmem:[%s1 + $0xd0] sm:$0xff]
  %v121 = vld [vmem:[%s1 + $0xd8] sm:$0xff]
  %v122 = vld [vmem:[%s1 + $0xe0] sm:$0xff]
  %v123 = vld [vmem:[%s1 + $0xe8] sm:$0xff]
  %v124 = vld [vmem:[%s1 + $0xf0] sm:$0xff]
  %v125 = vld [vmem:[%s1 + $0xf8] sm:$0xff]
  %v126 = vld [vmem:[%s1 + $0x100] sm:$0xff]
  %v127 = vld [vmem:[%s1 + $0x108] sm:$0xff]
  %v128 = vld [vmem:[%s1 + $0x110] sm:$0xf]
  %v129 = vld [vmem:[%s1 + $0x118] sm:$0xf]
  %vm130 = vcmask 97280
  %v132 = vsel %vm130, %v39, 0
  %v135 = vsel %vm130, %v41, 0
  %v138 = vsel %vm130, %v43, 0
  %v141 = vsel %vm130, %v45, 0
  %v144 = vsel %vm130, %v47, 0
  %v147 = vsel %vm130, %v49, 0
  %v150 = vsel %vm130, %v51, 0
  %v153 = vsel %vm130, %v53, 0
  %v156 = vsel %vm130, %v55, 0
  %v159 = vsel %vm130, %v57, 0
  %v162 = vsel %vm130, %v59, 0
  %v165 = vsel %vm130, %v61, 0
  %v168 = vsel %vm130, %v63, 0
  %v171 = vsel %vm130, %v65, 0
  %v174 = vsel %vm130, %v67, 0
  %v177 = vsel %vm130, %v69, 0
  %v180 = vsel %vm130, %v71, 0
  %v183 = vsel %vm130, %v73, 0
  %v186 = vsel %vm130, %v75, 0
  %v189 = vsel %vm130, %v77, 0
  %v192 = vsel %vm130, %v79, 0
  %v195 = vsel %vm130, %v81, 0
  %v198 = vsel %vm130, %v83, 0
  %v201 = vsel %vm130, %v85, 0
  %v204 = vsel %vm130, %v87, 0
  %v207 = vsel %vm130, %v89, 0
  %v210 = vsel %vm130, %v91, 0
  %v213 = vsel %vm130, %v93, 0
  %vm215 = vcmask 1043456
  %v217 = vsel %vm215, %v128, 0
  %v220 = vsel %vm215, %v129, 0
  %222 = vmatpush.msra.mxu0 %v124
  %223 = vmatpush.msra.mxu0 %v122
  %224 = vmatpush.msra.mxu0 %v120
  %225 = vmatpush.msra.mxu0 %v118
  %226 = vmatpush.msra.mxu0 %v116
  %227 = vmatpush.msra.mxu0 %v114
  %228 = vmatpush.msra.mxu0 %v112
  %229 = vmatpush.msra.mxu0 %v110
  %230 = vmatpush.msra.mxu0 %v108
  %231 = vmatpush.msra.mxu0 %v106
  %232 = vmatpush.msra.mxu0 %v104
  %233 = vmatpush.msra.mxu0 %v102
  %234 = vmatpush.msra.mxu0 %v100
  %235 = vmatpush.msra.mxu0 %v98
  %236 = vmatpush.msra.mxu0 %v96
  %237 = vmatpush.msra.mxu0 %v94
  %238 = vmatmul.f32.gmra.mxu0 %v38
  %v239 = vpop.f32.mrf.mxu0
  %v240 = vadd.f32 0.0, %v239
  %241 = vmatmul.f32.gmra.mxu0 %v40
  %v242 = vpop.f32.mrf.mxu0
  %v243 = vadd.f32 0.0, %v242
  %244 = vmatmul.f32.gmra.mxu0 %v42
  %v245 = vpop.f32.mrf.mxu0
  %v246 = vadd.f32 0.0, %v245
  %247 = vmatmul.f32.gmra.mxu0 %v44
  %v248 = vpop.f32.mrf.mxu0
  %v249 = vadd.f32 0.0, %v248
  %250 = vmatmul.f32.gmra.mxu0 %v46
  %v251 = vpop.f32.mrf.mxu0
  %v252 = vadd.f32 0.0, %v251
  %253 = vmatmul.f32.gmra.mxu0 %v48
  %v254 = vpop.f32.mrf.mxu0
  %v255 = vadd.f32 0.0, %v254
  %256 = vmatmul.f32.gmra.mxu0 %v50
  %v257 = vpop.f32.mrf.mxu0
  %v258 = vadd.f32 0.0, %v257
  %259 = vmatmul.f32.gmra.mxu0 %v52
  %v260 = vpop.f32.mrf.mxu0
  %v261 = vadd.f32 0.0, %v260
  %262 = vmatmul.f32.gmra.mxu0 %v54
  %v263 = vpop.f32.mrf.mxu0
  %v264 = vadd.f32 0.0, %v263
  %265 = vmatmul.f32.gmra.mxu0 %v56
  %v266 = vpop.f32.mrf.mxu0
  %v267 = vadd.f32 0.0, %v266
  %268 = vmatmul.f32.gmra.mxu0 %v58
  %v269 = vpop.f32.mrf.mxu0
  %v270 = vadd.f32 0.0, %v269
  %271 = vmatmul.f32.gmra.mxu0 %v60
  %v272 = vpop.f32.mrf.mxu0
  %v273 = vadd.f32 0.0, %v272
  %274 = vmatmul.f32.gmra.mxu0 %v62
  %v275 = vpop.f32.mrf.mxu0
  %v276 = vadd.f32 0.0, %v275
  %277 = vmatmul.f32.gmra.mxu0 %v64
  %v278 = vpop.f32.mrf.mxu0
  %v279 = vadd.f32 0.0, %v278
  %280 = vmatmul.f32.gmra.mxu0 %v66
  %v281 = vpop.f32.mrf.mxu0
  %v282 = vadd.f32 0.0, %v281
  %283 = vmatmul.f32.gmra.mxu0 %v68
  %v284 = vpop.f32.mrf.mxu0
  %v285 = vadd.f32 0.0, %v284
  %286 = vmatmul.f32.gmra.mxu0 %v70
  %v287 = vpop.f32.mrf.mxu0
  %v288 = vadd.f32 0.0, %v287
  %289 = vmatmul.f32.gmra.mxu0 %v72
  %v290 = vpop.f32.mrf.mxu0
  %v291 = vadd.f32 0.0, %v290
  %292 = vmatmul.f32.gmra.mxu0 %v74
  %v293 = vpop.f32.mrf.mxu0
  %v294 = vadd.f32 0.0, %v293
  %295 = vmatmul.f32.gmra.mxu0 %v76
  %v296 = vpop.f32.mrf.mxu0
  %v297 = vadd.f32 0.0, %v296
  %298 = vmatmul.f32.gmra.mxu0 %v78
  %v299 = vpop.f32.mrf.mxu0
  %v300 = vadd.f32 0.0, %v299
  %301 = vmatmul.f32.gmra.mxu0 %v80
  %v302 = vpop.f32.mrf.mxu0
  %v303 = vadd.f32 0.0, %v302
  %304 = vmatmul.f32.gmra.mxu0 %v82
  %v305 = vpop.f32.mrf.mxu0
  %v306 = vadd.f32 0.0, %v305
  %307 = vmatmul.f32.gmra.mxu0 %v84
  %v308 = vpop.f32.mrf.mxu0
  %v309 = vadd.f32 0.0, %v308
  %310 = vmatmul.f32.gmra.mxu0 %v86
  %v311 = vpop.f32.mrf.mxu0
  %v312 = vadd.f32 0.0, %v311
  %313 = vmatmul.f32.gmra.mxu0 %v88
  %v314 = vpop.f32.mrf.mxu0
  %v315 = vadd.f32 0.0, %v314
  %316 = vmatmul.f32.gmra.mxu0 %v90
  %v317 = vpop.f32.mrf.mxu0
  %v318 = vadd.f32 0.0, %v317
  %319 = vmatmul.f32.gmra.mxu0 %v92
  %v320 = vpop.f32.mrf.mxu0
  %v321 = vadd.f32 0.0, %v320
  %322 = vdwg.mxu0
  %323 = vmatpush.msra.mxu0 0.0
  %324 = vmatpush.msra.mxu0 0.0
  %325 = vmatpush.msra.mxu0 0.0
  %326 = vmatpush.msra.mxu0 0.0
  %327 = vmatpush.msra.mxu0 0.0
  %328 = vmatpush.msra.mxu0 0.0
  %329 = vmatpush.msra.mxu0 0.0
  %330 = vmatpush.msra.mxu0 0.0
  %331 = vmatpush.msra.mxu0 0.0
  %332 = vmatpush.msra.mxu0 0.0
  %333 = vmatpush.msra.mxu0 0.0
  %334 = vmatpush.msra.mxu0 0.0
  %335 = vmatpush.msra.mxu0 0.0
  %336 = vmatpush.msra.mxu0 0.0
  %337 = vmatpush.msra.mxu0 %v217
  %338 = vmatpush.msra.mxu0 %v126
  %339 = vmatmul.f32.gmra.mxu0 %v132
  %v340 = vpop.f32.mrf.mxu0
  %v341 = vadd.f32 %v240, %v340
  %342 = vmatmul.f32.gmra.mxu0 %v135
  %v343 = vpop.f32.mrf.mxu0
  %v344 = vadd.f32 %v243, %v343
  %345 = vmatmul.f32.gmra.mxu0 %v138
  %v346 = vpop.f32.mrf.mxu0
  %v347 = vadd.f32 %v246, %v346
  %348 = vmatmul.f32.gmra.mxu0 %v141
  %v349 = vpop.f32.mrf.mxu0
  %v350 = vadd.f32 %v249, %v349
  %351 = vmatmul.f32.gmra.mxu0 %v144
  %v352 = vpop.f32.mrf.mxu0
  %v353 = vadd.f32 %v252, %v352
  %354 = vmatmul.f32.gmra.mxu0 %v147
  %v355 = vpop.f32.mrf.mxu0
  %v356 = vadd.f32 %v255, %v355
  %357 = vmatmul.f32.gmra.mxu0 %v150
  %v358 = vpop.f32.mrf.mxu0
  %v359 = vadd.f32 %v258, %v358
  %360 = vmatmul.f32.gmra.mxu0 %v153
  %v361 = vpop.f32.mrf.mxu0
  %v362 = vadd.f32 %v261, %v361
  %363 = vmatmul.f32.gmra.mxu0 %v156
  %v364 = vpop.f32.mrf.mxu0
  %v365 = vadd.f32 %v264, %v364
  %366 = vmatmul.f32.gmra.mxu0 %v159
  %v367 = vpop.f32.mrf.mxu0
  %v368 = vadd.f32 %v267, %v367
  %369 = vmatmul.f32.gmra.mxu0 %v162
  %v370 = vpop.f32.mrf.mxu0
  %v371 = vadd.f32 %v270, %v370
  %372 = vmatmul.f32.gmra.mxu0 %v165
  %v373 = vpop.f32.mrf.mxu0
  %v374 = vadd.f32 %v273, %v373
  %375 = vmatmul.f32.gmra.mxu0 %v168
  %v376 = vpop.f32.mrf.mxu0
  %v377 = vadd.f32 %v276, %v376
  %378 = vmatmul.f32.gmra.mxu0 %v171
  %v379 = vpop.f32.mrf.mxu0
  %v380 = vadd.f32 %v279, %v379
  %381 = vmatmul.f32.gmra.mxu0 %v174
  %v382 = vpop.f32.mrf.mxu0
  %v383 = vadd.f32 %v282, %v382
  %384 = vmatmul.f32.gmra.mxu0 %v177
  %v385 = vpop.f32.mrf.mxu0
  %v386 = vadd.f32 %v285, %v385
  %387 = vmatmul.f32.gmra.mxu0 %v180
  %v388 = vpop.f32.mrf.mxu0
  %v389 = vadd.f32 %v288, %v388
  %390 = vmatmul.f32.gmra.mxu0 %v183
  %v391 = vpop.f32.mrf.mxu0
  %v392 = vadd.f32 %v291, %v391
  %393 = vmatmul.f32.gmra.mxu0 %v186
  %v394 = vpop.f32.mrf.mxu0
  %v395 = vadd.f32 %v294, %v394
  %396 = vmatmul.f32.gmra.mxu0 %v189
  %v397 = vpop.f32.mrf.mxu0
  %v398 = vadd.f32 %v297, %v397
  %399 = vmatmul.f32.gmra.mxu0 %v192
  %v400 = vpop.f32.mrf.mxu0
  %v401 = vadd.f32 %v300, %v400
  %402 = vmatmul.f32.gmra.mxu0 %v195
  %v403 = vpop.f32.mrf.mxu0
  %v404 = vadd.f32 %v303, %v403
  %405 = vmatmul.f32.gmra.mxu0 %v198
  %v406 = vpop.f32.mrf.mxu0
  %v407 = vadd.f32 %v306, %v406
  %408 = vmatmul.f32.gmra.mxu0 %v201
  %v409 = vpop.f32.mrf.mxu0
  %v410 = vadd.f32 %v309, %v409
  %411 = vmatmul.f32.gmra.mxu0 %v204
  %v412 = vpop.f32.mrf.mxu0
  %v413 = vadd.f32 %v312, %v412
  %414 = vmatmul.f32.gmra.mxu0 %v207
  %v415 = vpop.f32.mrf.mxu0
  %v416 = vadd.f32 %v315, %v415
  %417 = vmatmul.f32.gmra.mxu0 %v210
  %v418 = vpop.f32.mrf.mxu0
  %v419 = vadd.f32 %v318, %v418
  %420 = vmatmul.f32.gmra.mxu0 %v213
  %v421 = vpop.f32.mrf.mxu0
  %v422 = vadd.f32 %v321, %v421
  %423 = vdwg.mxu0
  %424 = vmatpush.msra.mxu0 %v125
  %425 = vmatpush.msra.mxu0 %v123
  %426 = vmatpush.msra.mxu0 %v121
  %427 = vmatpush.msra.mxu0 %v119
  %428 = vmatpush.msra.mxu0 %v117
  %429 = vmatpush.msra.mxu0 %v115
  %430 = vmatpush.msra.mxu0 %v113
  %431 = vmatpush.msra.mxu0 %v111
  %432 = vmatpush.msra.mxu0 %v109
  %433 = vmatpush.msra.mxu0 %v107
  %434 = vmatpush.msra.mxu0 %v105
  %435 = vmatpush.msra.mxu0 %v103
  %436 = vmatpush.msra.mxu0 %v101
  %437 = vmatpush.msra.mxu0 %v99
  %438 = vmatpush.msra.mxu0 %v97
  %439 = vmatpush.msra.mxu0 %v95
  %440 = vmatmul.f32.gmra.mxu0 %v38
  %v441 = vpop.f32.mrf.mxu0
  %v442 = vadd.f32 0.0, %v441
  %443 = vmatmul.f32.gmra.mxu0 %v40
  %v444 = vpop.f32.mrf.mxu0
  %v445 = vadd.f32 0.0, %v444
  %446 = vmatmul.f32.gmra.mxu0 %v42
  %v447 = vpop.f32.mrf.mxu0
  %v448 = vadd.f32 0.0, %v447
  %449 = vmatmul.f32.gmra.mxu0 %v44
  %v450 = vpop.f32.mrf.mxu0
  %v451 = vadd.f32 0.0, %v450
  %452 = vmatmul.f32.gmra.mxu0 %v46
  %v453 = vpop.f32.mrf.mxu0
  %v454 = vadd.f32 0.0, %v453
  %455 = vmatmul.f32.gmra.mxu0 %v48
  %v456 = vpop.f32.mrf.mxu0
  %v457 = vadd.f32 0.0, %v456
  %458 = vmatmul.f32.gmra.mxu0 %v50
  %v459 = vpop.f32.mrf.mxu0
  %v460 = vadd.f32 0.0, %v459
  %461 = vmatmul.f32.gmra.mxu0 %v52
  %v462 = vpop.f32.mrf.mxu0
  %v463 = vadd.f32 0.0, %v462
  %464 = vmatmul.f32.gmra.mxu0 %v54
  %v465 = vpop.f32.mrf.mxu0
  %v466 = vadd.f32 0.0, %v465
  %467 = vmatmul.f32.gmra.mxu0 %v56
  %v468 = vpop.f32.mrf.mxu0
  %v469 = vadd.f32 0.0, %v468
  %470 = vmatmul.f32.gmra.mxu0 %v58
  %v471 = vpop.f32.mrf.mxu0
  %v472 = vadd.f32 0.0, %v471
  %473 = vmatmul.f32.gmra.mxu0 %v60
  %v474 = vpop.f32.mrf.mxu0
  %v475 = vadd.f32 0.0, %v474
  %476 = vmatmul.f32.gmra.mxu0 %v62
  %v477 = vpop.f32.mrf.mxu0
  %v478 = vadd.f32 0.0, %v477
  %479 = vmatmul.f32.gmra.mxu0 %v64
  %v480 = vpop.f32.mrf.mxu0
  %v481 = vadd.f32 0.0, %v480
  %482 = vmatmul.f32.gmra.mxu0 %v66
  %v483 = vpop.f32.mrf.mxu0
  %v484 = vadd.f32 0.0, %v483
  %485 = vmatmul.f32.gmra.mxu0 %v68
  %v486 = vpop.f32.mrf.mxu0
  %v487 = vadd.f32 0.0, %v486
  %488 = vmatmul.f32.gmra.mxu0 %v70
  %v489 = vpop.f32.mrf.mxu0
  %v490 = vadd.f32 0.0, %v489
  %491 = vmatmul.f32.gmra.mxu0 %v72
  %v492 = vpop.f32.mrf.mxu0
  %v493 = vadd.f32 0.0, %v492
  %494 = vmatmul.f32.gmra.mxu0 %v74
  %v495 = vpop.f32.mrf.mxu0
  %v496 = vadd.f32 0.0, %v495
  %497 = vmatmul.f32.gmra.mxu0 %v76
  %v498 = vpop.f32.mrf.mxu0
  %v499 = vadd.f32 0.0, %v498
  %500 = vmatmul.f32.gmra.mxu0 %v78
  %v501 = vpop.f32.mrf.mxu0
  %v502 = vadd.f32 0.0, %v501
  %503 = vmatmul.f32.gmra.mxu0 %v80
  %v504 = vpop.f32.mrf.mxu0
  %v505 = vadd.f32 0.0, %v504
  %506 = vmatmul.f32.gmra.mxu0 %v82
  %v507 = vpop.f32.mrf.mxu0
  %v508 = vadd.f32 0.0, %v507
  %509 = vmatmul.f32.gmra.mxu0 %v84
  %v510 = vpop.f32.mrf.mxu0
  %v511 = vadd.f32 0.0, %v510
  %512 = vmatmul.f32.gmra.mxu0 %v86
  %v513 = vpop.f32.mrf.mxu0
  %v514 = vadd.f32 0.0, %v513
  %515 = vmatmul.f32.gmra.mxu0 %v88
  %v516 = vpop.f32.mrf.mxu0
  %v517 = vadd.f32 0.0, %v516
  %518 = vmatmul.f32.gmra.mxu0 %v90
  %v519 = vpop.f32.mrf.mxu0
  %v520 = vadd.f32 0.0, %v519
  %521 = vmatmul.f32.gmra.mxu0 %v92
  %v522 = vpop.f32.mrf.mxu0
  %v523 = vadd.f32 0.0, %v522
  %524 = vdwg.mxu0
  %525 = vmatpush.msra.mxu0 0.0
  %526 = vmatpush.msra.mxu0 0.0
  %527 = vmatpush.msra.mxu0 0.0
  %528 = vmatpush.msra.mxu0 0.0
  %529 = vmatpush.msra.mxu0 0.0
  %530 = vmatpush.msra.mxu0 0.0
  %531 = vmatpush.msra.mxu0 0.0
  %532 = vmatpush.msra.mxu0 0.0
  %533 = vmatpush.msra.mxu0 0.0
  %534 = vmatpush.msra.mxu0 0.0
  %535 = vmatpush.msra.mxu0 0.0
  %536 = vmatpush.msra.mxu0 0.0
  %537 = vmatpush.msra.mxu0 0.0
  %538 = vmatpush.msra.mxu0 0.0
  %539 = vmatpush.msra.mxu0 %v220
  %540 = vmatpush.msra.mxu0 %v127
  %541 = vmatmul.f32.gmra.mxu0 %v132
  %v542 = vpop.f32.mrf.mxu0
  %v543 = vadd.f32 %v442, %v542
  %544 = vmatmul.f32.gmra.mxu0 %v135
  %v545 = vpop.f32.mrf.mxu0
  %v546 = vadd.f32 %v445, %v545
  %547 = vmatmul.f32.gmra.mxu0 %v138
  %v548 = vpop.f32.mrf.mxu0
  %v549 = vadd.f32 %v448, %v548
  %550 = vmatmul.f32.gmra.mxu0 %v141
  %v551 = vpop.f32.mrf.mxu0
  %v552 = vadd.f32 %v451, %v551
  %553 = vmatmul.f32.gmra.mxu0 %v144
  %v554 = vpop.f32.mrf.mxu0
  %v555 = vadd.f32 %v454, %v554
  %556 = vmatmul.f32.gmra.mxu0 %v147
  %v557 = vpop.f32.mrf.mxu0
  %v558 = vadd.f32 %v457, %v557
  %559 = vmatmul.f32.gmra.mxu0 %v150
  %v560 = vpop.f32.mrf.mxu0
  %v561 = vadd.f32 %v460, %v560
  %562 = vmatmul.f32.gmra.mxu0 %v153
  %v563 = vpop.f32.mrf.mxu0
  %v564 = vadd.f32 %v463, %v563
  %565 = vmatmul.f32.gmra.mxu0 %v156
  %v566 = vpop.f32.mrf.mxu0
  %v567 = vadd.f32 %v466, %v566
  %568 = vmatmul.f32.gmra.mxu0 %v159
  %v569 = vpop.f32.mrf.mxu0
  %v570 = vadd.f32 %v469, %v569
  %571 = vmatmul.f32.gmra.mxu0 %v162
  %v572 = vpop.f32.mrf.mxu0
  %v573 = vadd.f32 %v472, %v572
  %574 = vmatmul.f32.gmra.mxu0 %v165
  %v575 = vpop.f32.mrf.mxu0
  %v576 = vadd.f32 %v475, %v575
  %577 = vmatmul.f32.gmra.mxu0 %v168
  %v578 = vpop.f32.mrf.mxu0
  %v579 = vadd.f32 %v478, %v578
  %580 = vmatmul.f32.gmra.mxu0 %v171
  %v581 = vpop.f32.mrf.mxu0
  %v582 = vadd.f32 %v481, %v581
  %583 = vmatmul.f32.gmra.mxu0 %v174
  %v584 = vpop.f32.mrf.mxu0
  %v585 = vadd.f32 %v484, %v584
  %586 = vmatmul.f32.gmra.mxu0 %v177
  %v587 = vpop.f32.mrf.mxu0
  %v588 = vadd.f32 %v487, %v587
  %589 = vmatmul.f32.gmra.mxu0 %v180
  %v590 = vpop.f32.mrf.mxu0
  %v591 = vadd.f32 %v490, %v590
  %592 = vmatmul.f32.gmra.mxu0 %v183
  %v593 = vpop.f32.mrf.mxu0
  %v594 = vadd.f32 %v493, %v593
  %595 = vmatmul.f32.gmra.mxu0 %v186
  %v596 = vpop.f32.mrf.mxu0
  %v597 = vadd.f32 %v496, %v596
  %598 = vmatmul.f32.gmra.mxu0 %v189
  %v599 = vpop.f32.mrf.mxu0
  %v600 = vadd.f32 %v499, %v599
  %601 = vmatmul.f32.gmra.mxu0 %v192
  %v602 = vpop.f32.mrf.mxu0
  %v603 = vadd.f32 %v502, %v602
  %604 = vmatmul.f32.gmra.mxu0 %v195
  %v605 = vpop.f32.mrf.mxu0
  %v606 = vadd.f32 %v505, %v605
  %607 = vmatmul.f32.gmra.mxu0 %v198
  %v608 = vpop.f32.mrf.mxu0
  %v609 = vadd.f32 %v508, %v608
  %610 = vmatmul.f32.gmra.mxu0 %v201
  %v611 = vpop.f32.mrf.mxu0
  %v612 = vadd.f32 %v511, %v611
  %613 = vmatmul.f32.gmra.mxu0 %v204
  %v614 = vpop.f32.mrf.mxu0
  %v615 = vadd.f32 %v514, %v614
  %616 = vmatmul.f32.gmra.mxu0 %v207
  %v617 = vpop.f32.mrf.mxu0
  %v618 = vadd.f32 %v517, %v617
  %619 = vmatmul.f32.gmra.mxu0 %v210
  %v620 = vpop.f32.mrf.mxu0
  %v621 = vadd.f32 %v520, %v620
  %622 = vmatmul.f32.gmra.mxu0 %v213
  %v623 = vpop.f32.mrf.mxu0
  %v624 = vadd.f32 %v523, %v623
  %625 = vdwg.mxu0
  %v626 = vmax.f32 %v341, %v543
  %v627 = vmax.f32 %v344, %v546
  %v628 = vmax.f32 %v347, %v549
  %v629 = vmax.f32 %v350, %v552
  %v630 = vmax.f32 %v353, %v555
  %v631 = vmax.f32 %v356, %v558
  %v632 = vmax.f32 %v359, %v561
  %v633 = vmax.f32 %v362, %v564
  %v634 = vmax.f32 %v365, %v567
  %v635 = vmax.f32 %v368, %v570
  %v636 = vmax.f32 %v371, %v573
  %v637 = vmax.f32 %v374, %v576
  %v638 = vmax.f32 %v377, %v579
  %v639 = vmax.f32 %v380, %v582
  %v640 = vmax.f32 %v383, %v585
  %v641 = vmax.f32 %v386, %v588
  %v642 = vmax.f32 %v389, %v591
  %v643 = vmax.f32 %v392, %v594
  %v644 = vmax.f32 %v395, %v597
  %v645 = vmax.f32 %v398, %v600
  %v646 = vmax.f32 %v401, %v603
  %v647 = vmax.f32 %v404, %v606
  %v648 = vmax.f32 %v407, %v609
  %v649 = vmax.f32 %v410, %v612
  %v650 = vmax.f32 %v413, %v615
  %v651 = vmax.f32 %v416, %v618
  %v652 = vmax.f32 %v419, %v621
  %v653 = vmax.f32 %v422, %v624
  %v654 = vld [vmem:[%s2] sm:$0x1]
  %v656 = vperm.slane %v654, 0
  %v658 = vadd.f32 %v626, %v656
  %v659 = vadd.f32 %v627, %v656
  %v660 = vadd.f32 %v628, %v656
  %v661 = vadd.f32 %v629, %v656
  %v662 = vadd.f32 %v630, %v656
  %v663 = vadd.f32 %v631, %v656
  %v664 = vadd.f32 %v632, %v656
  %v665 = vadd.f32 %v633, %v656
  %v666 = vadd.f32 %v634, %v656
  %v667 = vadd.f32 %v635, %v656
  %v668 = vadd.f32 %v636, %v656
  %v669 = vadd.f32 %v637, %v656
  %v670 = vadd.f32 %v638, %v656
  %v671 = vadd.f32 %v639, %v656
  %v672 = vadd.f32 %v640, %v656
  %v673 = vadd.f32 %v641, %v656
  %v674 = vadd.f32 %v642, %v656
  %v675 = vadd.f32 %v643, %v656
  %v676 = vadd.f32 %v644, %v656
  %v677 = vadd.f32 %v645, %v656
  %v678 = vadd.f32 %v646, %v656
  %v679 = vadd.f32 %v647, %v656
  %v680 = vadd.f32 %v648, %v656
  %v681 = vadd.f32 %v649, %v656
  %v682 = vadd.f32 %v650, %v656
  %v683 = vadd.f32 %v651, %v656
  %v684 = vadd.f32 %v652, %v656
  %v685 = vadd.f32 %v653, %v656
  %v686 = vmax.f32 %v658, 0.0
  %v687 = vmax.f32 %v659, 0.0
  %v688 = vmax.f32 %v660, 0.0
  %v689 = vmax.f32 %v661, 0.0
  %v690 = vmax.f32 %v662, 0.0
  %v691 = vmax.f32 %v663, 0.0
  %v692 = vmax.f32 %v664, 0.0
  %v693 = vmax.f32 %v665, 0.0
  %v694 = vmax.f32 %v666, 0.0
  %v695 = vmax.f32 %v667, 0.0
  %v696 = vmax.f32 %v668, 0.0
  %v697 = vmax.f32 %v669, 0.0
  %v698 = vmax.f32 %v670, 0.0
  %v699 = vmax.f32 %v671, 0.0
  %v700 = vmax.f32 %v672, 0.0
  %v701 = vmax.f32 %v673, 0.0
  %v702 = vmax.f32 %v674, 0.0
  %v703 = vmax.f32 %v675, 0.0
  %v704 = vmax.f32 %v676, 0.0
  %v705 = vmax.f32 %v677, 0.0
  %v706 = vmax.f32 %v678, 0.0
  %v707 = vmax.f32 %v679, 0.0
  %v708 = vmax.f32 %v680, 0.0
  %v709 = vmax.f32 %v681, 0.0
  %v710 = vmax.f32 %v682, 0.0
  %v711 = vmax.f32 %v683, 0.0
  %v712 = vmax.f32 %v684, 0.0
  %v713 = vmax.f32 %v685, 0.0
  %v714 = vmax.f32 %v686, %v700
  %v715 = vmax.f32 %v687, %v701
  %v716 = vmax.f32 %v688, %v702
  %v717 = vmax.f32 %v689, %v703
  %v718 = vmax.f32 %v690, %v704
  %v719 = vmax.f32 %v691, %v705
  %v720 = vmax.f32 %v692, %v706
  %v721 = vmax.f32 %v693, %v707
  %v722 = vmax.f32 %v694, %v708
  %v723 = vmax.f32 %v695, %v709
  %v724 = vmax.f32 %v696, %v710
  %v725 = vmax.f32 %v697, %v711
  %v726 = vmax.f32 %v698, %v712
  %v727 = vmax.f32 %v699, %v713
  %v728 = vld [vmem:[%s3] sm:$0xff]
  %v729 = vld [vmem:[%s3 + $0x8] sm:$0xff]
  %v730 = vld [vmem:[%s3 + $0x10] sm:$0xff]
  %v731 = vld [vmem:[%s3 + $0x18] sm:$0xff]
  %v732 = vld [vmem:[%s3 + $0x20] sm:$0xff]
  %v733 = vld [vmem:[%s3 + $0x28] sm:$0xff]
  %v734 = vld [vmem:[%s3 + $0x30] sm:$0xff]
  %v735 = vld [vmem:[%s3 + $0x38] sm:$0xff]
  %v736 = vld [vmem:[%s3 + $0x40] sm:$0xff]
  %v737 = vld [vmem:[%s3 + $0x48] sm:$0xff]
  %v738 = vld [vmem:[%s3 + $0x50] sm:$0xff]
  %v739 = vld [vmem:[%s3 + $0x58] sm:$0xff]
  %v740 = vld [vmem:[%s3 + $0x60] sm:$0xff]
  %v741 = vld [vmem:[%s3 + $0x68] sm:$0xff]
  %v742 = vld [vmem:[%s3 + $0x70] sm:$0xff]
  %v743 = vld [vmem:[%s3 + $0x78] sm:$0xff]
  %v744 = vld [vmem:[%s3 + $0x80] sm:$0xff]
  %v745 = vld [vmem:[%s3 + $0x88] sm:$0xff]
  %v746 = vld [vmem:[%s3 + $0x90] sm:$0xff]
  %v747 = vld [vmem:[%s3 + $0x98] sm:$0xff]
  %v748 = vld [vmem:[%s3 + $0xa0] sm:$0xff]
  %v749 = vld [vmem:[%s3 + $0xa8] sm:$0xff]
  %v750 = vld [vmem:[%s3 + $0xb0] sm:$0xff]
  %v751 = vld [vmem:[%s3 + $0xb8] sm:$0xff]
  %v752 = vld [vmem:[%s3 + $0xc0] sm:$0xff]
  %v753 = vld [vmem:[%s3 + $0xc8] sm:$0xff]
  %v754 = vld [vmem:[%s3 + $0xd0] sm:$0xff]
  %v755 = vld [vmem:[%s3 + $0xd8] sm:$0xff]
  %v756 = vld [vmem:[%s3 + $0xe0] sm:$0xff]
  %v757 = vld [vmem:[%s3 + $0xe8] sm:$0xff]
  %v758 = vld [vmem:[%s3 + $0xf0] sm:$0xff]
  %v759 = vld [vmem:[%s3 + $0xf8] sm:$0xff]
  %v760 = vld [vmem:[%s3 + $0x100] sm:$0xff]
  %v761 = vld [vmem:[%s3 + $0x108] sm:$0xff]
  %v762 = vld [vmem:[%s3 + $0x110] sm:$0xff]
  %v763 = vld [vmem:[%s3 + $0x118] sm:$0xff]
  %v764 = vld [vmem:[%s3 + $0x120] sm:$0xff]
  %v765 = vld [vmem:[%s3 + $0x128] sm:$0xff]
  %v766 = vld [vmem:[%s3 + $0x130] sm:$0xff]
  %v767 = vld [vmem:[%s3 + $0x138] sm:$0xff]
  %v768 = vld [vmem:[%s3 + $0x140] sm:$0xff]
  %v769 = vld [vmem:[%s3 + $0x148] sm:$0xff]
  %v770 = vld [vmem:[%s3 + $0x150] sm:$0xff]
  %v771 = vld [vmem:[%s3 + $0x158] sm:$0xff]
  %v772 = vld [vmem:[%s3 + $0x160] sm:$0xff]
  %v773 = vld [vmem:[%s3 + $0x168] sm:$0xff]
  %v774 = vld [vmem:[%s3 + $0x170] sm:$0xff]
  %v775 = vld [vmem:[%s3 + $0x178] sm:$0xff]
  %v776 = vld [vmem:[%s3 + $0x180] sm:$0xff]
  %v777 = vld [vmem:[%s3 + $0x188] sm:$0xff]
  %v778 = vld [vmem:[%s3 + $0x190] sm:$0xff]
  %v779 = vld [vmem:[%s3 + $0x198] sm:$0xff]
  %v780 = vld [vmem:[%s3 + $0x1a0] sm:$0xff]
  %v781 = vld [vmem:[%s3 + $0x1a8] sm:$0xff]
  %v782 = vld [vmem:[%s3 + $0x1b0] sm:$0xff]
  %v783 = vld [vmem:[%s3 + $0x1b8] sm:$0xff]
  %v784 = vld [vmem:[%s3 + $0x1c0] sm:$0xff]
  %v785 = vld [vmem:[%s3 + $0x1c8] sm:$0xff]
  %v786 = vld [vmem:[%s3 + $0x1d0] sm:$0xff]
  %v787 = vld [vmem:[%s3 + $0x1d8] sm:$0xff]
  %v788 = vld [vmem:[%s3 + $0x1e0] sm:$0xff]
  %v789 = vld [vmem:[%s3 + $0x1e8] sm:$0xff]
  %v790 = vld [vmem:[%s3 + $0x1f0] sm:$0xff]
  %v791 = vld [vmem:[%s3 + $0x1f8] sm:$0xff]
  %v792 = vld [vmem:[%s3 + $0x200] sm:$0xff]
  %v793 = vld [vmem:[%s3 + $0x208] sm:$0xff]
  %v794 = vld [vmem:[%s3 + $0x210] sm:$0xff]
  %v795 = vld [vmem:[%s3 + $0x218] sm:$0xff]
  %v796 = vld [vmem:[%s3 + $0x220] sm:$0xff]
  %v797 = vld [vmem:[%s3 + $0x228] sm:$0xff]
  %v798 = vld [vmem:[%s3 + $0x230] sm:$0xff]
  %v799 = vld [vmem:[%s3 + $0x238] sm:$0xff]
  %v800 = vld [vmem:[%s3 + $0x240] sm:$0xff]
  %v801 = vld [vmem:[%s3 + $0x248] sm:$0xff]
  %v802 = vld [vmem:[%s3 + $0x250] sm:$0xff]
  %v803 = vld [vmem:[%s3 + $0x258] sm:$0xff]
  %v804 = vld [vmem:[%s3 + $0x260] sm:$0xff]
  %v805 = vld [vmem:[%s3 + $0x268] sm:$0xff]
  %v806 = vld [vmem:[%s3 + $0x270] sm:$0xff]
  %v807 = vld [vmem:[%s3 + $0x278] sm:$0xff]
  %v808 = vld [vmem:[%s3 + $0x280] sm:$0xff]
  %v809 = vld [vmem:[%s3 + $0x288] sm:$0xff]
  %v810 = vld [vmem:[%s3 + $0x290] sm:$0xff]
  %v811 = vld [vmem:[%s3 + $0x298] sm:$0xff]
  %v812 = vld [vmem:[%s3 + $0x2a0] sm:$0xff]
  %v813 = vld [vmem:[%s3 + $0x2a8] sm:$0xff]
  %v814 = vld [vmem:[%s3 + $0x2b0] sm:$0xff]
  %v815 = vld [vmem:[%s3 + $0x2b8] sm:$0xff]
  %v816 = vld [vmem:[%s3 + $0x2c0] sm:$0xff]
  %v817 = vld [vmem:[%s3 + $0x2c8] sm:$0xff]
  %v818 = vld [vmem:[%s3 + $0x2d0] sm:$0xff]
  %v819 = vld [vmem:[%s3 + $0x2d8] sm:$0xff]
  %v820 = vld [vmem:[%s3 + $0x2e0] sm:$0xff]
  %v821 = vld [vmem:[%s3 + $0x2e8] sm:$0xff]
  %v822 = vld [vmem:[%s3 + $0x2f0] sm:$0xff]
  %v823 = vld [vmem:[%s3 + $0x2f8] sm:$0xff]
  %824 = vmatpush.msra.mxu0 %v758
  %825 = vmatpush.msra.mxu0 %v756
  %826 = vmatpush.msra.mxu0 %v754
  %827 = vmatpush.msra.mxu0 %v752
  %828 = vmatpush.msra.mxu0 %v750
  %829 = vmatpush.msra.mxu0 %v748
  %830 = vmatpush.msra.mxu0 %v746
  %831 = vmatpush.msra.mxu0 %v744
  %832 = vmatpush.msra.mxu0 %v742
  %833 = vmatpush.msra.mxu0 %v740
  %834 = vmatpush.msra.mxu0 %v738
  %835 = vmatpush.msra.mxu0 %v736
  %836 = vmatpush.msra.mxu0 %v734
  %837 = vmatpush.msra.mxu0 %v732
  %838 = vmatpush.msra.mxu0 %v730
  %839 = vmatpush.msra.mxu0 %v728
  %840 = vmatmul.f32.gmra.mxu0 %v714
  %v841 = vpop.f32.mrf.mxu0
  %v842 = vadd.f32 0.0, %v841
  %843 = vmatmul.f32.gmra.mxu0 %v715
  %v844 = vpop.f32.mrf.mxu0
  %v845 = vadd.f32 0.0, %v844
  %846 = vmatmul.f32.gmra.mxu0 %v716
  %v847 = vpop.f32.mrf.mxu0
  %v848 = vadd.f32 0.0, %v847
  %849 = vmatmul.f32.gmra.mxu0 %v717
  %v850 = vpop.f32.mrf.mxu0
  %v851 = vadd.f32 0.0, %v850
  %852 = vmatmul.f32.gmra.mxu0 %v718
  %v853 = vpop.f32.mrf.mxu0
  %v854 = vadd.f32 0.0, %v853
  %855 = vmatmul.f32.gmra.mxu0 %v719
  %v856 = vpop.f32.mrf.mxu0
  %v857 = vadd.f32 0.0, %v856
  %858 = vmatmul.f32.gmra.mxu0 %v720
  %v859 = vpop.f32.mrf.mxu0
  %v860 = vadd.f32 0.0, %v859
  %861 = vmatmul.f32.gmra.mxu0 %v721
  %v862 = vpop.f32.mrf.mxu0
  %v863 = vadd.f32 0.0, %v862
  %864 = vmatmul.f32.gmra.mxu0 %v722
  %v865 = vpop.f32.mrf.mxu0
  %v866 = vadd.f32 0.0, %v865
  %867 = vmatmul.f32.gmra.mxu0 %v723
  %v868 = vpop.f32.mrf.mxu0
  %v869 = vadd.f32 0.0, %v868
  %870 = vmatmul.f32.gmra.mxu0 %v724
  %v871 = vpop.f32.mrf.mxu0
  %v872 = vadd.f32 0.0, %v871
  %873 = vmatmul.f32.gmra.mxu0 %v725
  %v874 = vpop.f32.mrf.mxu0
  %v875 = vadd.f32 0.0, %v874
  %876 = vdwg.mxu0
  %877 = vmatpush.msra.mxu0 %v790
  %878 = vmatpush.msra.mxu0 %v788
  %879 = vmatpush.msra.mxu0 %v786
  %880 = vmatpush.msra.mxu0 %v784
  %881 = vmatpush.msra.mxu0 %v782
  %882 = vmatpush.msra.mxu0 %v780
  %883 = vmatpush.msra.mxu0 %v778
  %884 = vmatpush.msra.mxu0 %v776
  %885 = vmatpush.msra.mxu0 %v774
  %886 = vmatpush.msra.mxu0 %v772
  %887 = vmatpush.msra.mxu0 %v770
  %888 = vmatpush.msra.mxu0 %v768
  %889 = vmatpush.msra.mxu0 %v766
  %890 = vmatpush.msra.mxu0 %v764
  %891 = vmatpush.msra.mxu0 %v762
  %892 = vmatpush.msra.mxu0 %v760
  %893 = vmatmul.f32.gmra.mxu0 %v715
  %v894 = vpop.f32.mrf.mxu0
  %v895 = vadd.f32 %v842, %v894
  %896 = vmatmul.f32.gmra.mxu0 %v716
  %v897 = vpop.f32.mrf.mxu0
  %v898 = vadd.f32 %v845, %v897
  %899 = vmatmul.f32.gmra.mxu0 %v717
  %v900 = vpop.f32.mrf.mxu0
  %v901 = vadd.f32 %v848, %v900
  %902 = vmatmul.f32.gmra.mxu0 %v718
  %v903 = vpop.f32.mrf.mxu0
  %v904 = vadd.f32 %v851, %v903
  %905 = vmatmul.f32.gmra.mxu0 %v719
  %v906 = vpop.f32.mrf.mxu0
  %v907 = vadd.f32 %v854, %v906
  %908 = vmatmul.f32.gmra.mxu0 %v720
  %v909 = vpop.f32.mrf.mxu0
  %v910 = vadd.f32 %v857, %v909
  %911 = vmatmul.f32.gmra.mxu0 %v721
  %v912 = vpop.f32.mrf.mxu0
  %v913 = vadd.f32 %v860, %v912
  %914 = vmatmul.f32.gmra.mxu0 %v722
  %v915 = vpop.f32.mrf.mxu0
  %v916 = vadd.f32 %v863, %v915
  %917 = vmatmul.f32.gmra.mxu0 %v723
  %v918 = vpop.f32.mrf.mxu0
  %v919 = vadd.f32 %v866, %v918
  %920 = vmatmul.f32.gmra.mxu0 %v724
  %v921 = vpop.f32.mrf.mxu0
  %v922 = vadd.f32 %v869, %v921
  %923 = vmatmul.f32.gmra.mxu0 %v725
  %v924 = vpop.f32.mrf.mxu0
  %v925 = vadd.f32 %v872, %v924
  %926 = vmatmul.f32.gmra.mxu0 %v726
  %v927 = vpop.f32.mrf.mxu0
  %v928 = vadd.f32 %v875, %v927
  %929 = vdwg.mxu0
  %930 = vmatpush.msra.mxu0 %v822
  %931 = vmatpush.msra.mxu0 %v820
  %932 = vmatpush.msra.mxu0 %v818
  %933 = vmatpush.msra.mxu0 %v816
  %934 = vmatpush.msra.mxu0 %v814
  %935 = vmatpush.msra.mxu0 %v812
  %936 = vmatpush.msra.mxu0 %v810
  %937 = vmatpush.msra.mxu0 %v808
  %938 = vmatpush.msra.mxu0 %v806
  %939 = vmatpush.msra.mxu0 %v804
  %940 = vmatpush.msra.mxu0 %v802
  %941 = vmatpush.msra.mxu0 %v800
  %942 = vmatpush.msra.mxu0 %v798
  %943 = vmatpush.msra.mxu0 %v796
  %944 = vmatpush.msra.mxu0 %v794
  %945 = vmatpush.msra.mxu0 %v792
  %946 = vmatmul.f32.gmra.mxu0 %v716
  %v947 = vpop.f32.mrf.mxu0
  %v948 = vadd.f32 %v895, %v947
  %949 = vmatmul.f32.gmra.mxu0 %v717
  %v950 = vpop.f32.mrf.mxu0
  %v951 = vadd.f32 %v898, %v950
  %952 = vmatmul.f32.gmra.mxu0 %v718
  %v953 = vpop.f32.mrf.mxu0
  %v954 = vadd.f32 %v901, %v953
  %955 = vmatmul.f32.gmra.mxu0 %v719
  %v956 = vpop.f32.mrf.mxu0
  %v957 = vadd.f32 %v904, %v956
  %958 = vmatmul.f32.gmra.mxu0 %v720
  %v959 = vpop.f32.mrf.mxu0
  %v960 = vadd.f32 %v907, %v959
  %961 = vmatmul.f32.gmra.mxu0 %v721
  %v962 = vpop.f32.mrf.mxu0
  %v963 = vadd.f32 %v910, %v962
  %964 = vmatmul.f32.gmra.mxu0 %v722
  %v965 = vpop.f32.mrf.mxu0
  %v966 = vadd.f32 %v913, %v965
  %967 = vmatmul.f32.gmra.mxu0 %v723
  %v968 = vpop.f32.mrf.mxu0
  %v969 = vadd.f32 %v916, %v968
  %970 = vmatmul.f32.gmra.mxu0 %v724
  %v971 = vpop.f32.mrf.mxu0
  %v972 = vadd.f32 %v919, %v971
  %973 = vmatmul.f32.gmra.mxu0 %v725
  %v974 = vpop.f32.mrf.mxu0
  %v975 = vadd.f32 %v922, %v974
  %976 = vmatmul.f32.gmra.mxu0 %v726
  %v977 = vpop.f32.mrf.mxu0
  %v978 = vadd.f32 %v925, %v977
  %979 = vmatmul.f32.gmra.mxu0 %v727
  %v980 = vpop.f32.mrf.mxu0
  %v981 = vadd.f32 %v928, %v980
  %982 = vdwg.mxu0
  %983 = vmatpush.msra.mxu0 %v759
  %984 = vmatpush.msra.mxu0 %v757
  %985 = vmatpush.msra.mxu0 %v755
  %986 = vmatpush.msra.mxu0 %v753
  %987 = vmatpush.msra.mxu0 %v751
  %988 = vmatpush.msra.mxu0 %v749
  %989 = vmatpush.msra.mxu0 %v747
  %990 = vmatpush.msra.mxu0 %v745
  %991 = vmatpush.msra.mxu0 %v743
  %992 = vmatpush.msra.mxu0 %v741
  %993 = vmatpush.msra.mxu0 %v739
  %994 = vmatpush.msra.mxu0 %v737
  %995 = vmatpush.msra.mxu0 %v735
  %996 = vmatpush.msra.mxu0 %v733
  %997 = vmatpush.msra.mxu0 %v731
  %998 = vmatpush.msra.mxu0 %v729
  %999 = vmatmul.f32.gmra.mxu0 %v714
  %v1000 = vpop.f32.mrf.mxu0
  %v1001 = vadd.f32 0.0, %v1000
  %1002 = vmatmul.f32.gmra.mxu0 %v715
  %v1003 = vpop.f32.mrf.mxu0
  %v1004 = vadd.f32 0.0, %v1003
  %1005 = vmatmul.f32.gmra.mxu0 %v716
  %v1006 = vpop.f32.mrf.mxu0
  %v1007 = vadd.f32 0.0, %v1006
  %1008 = vmatmul.f32.gmra.mxu0 %v717
  %v1009 = vpop.f32.mrf.mxu0
  %v1010 = vadd.f32 0.0, %v1009
  %1011 = vmatmul.f32.gmra.mxu0 %v718
  %v1012 = vpop.f32.mrf.mxu0
  %v1013 = vadd.f32 0.0, %v1012
  %1014 = vmatmul.f32.gmra.mxu0 %v719
  %v1015 = vpop.f32.mrf.mxu0
  %v1016 = vadd.f32 0.0, %v1015
  %1017 = vmatmul.f32.gmra.mxu0 %v720
  %v1018 = vpop.f32.mrf.mxu0
  %v1019 = vadd.f32 0.0, %v1018
  %1020 = vmatmul.f32.gmra.mxu0 %v721
  %v1021 = vpop.f32.mrf.mxu0
  %v1022 = vadd.f32 0.0, %v1021
  %1023 = vmatmul.f32.gmra.mxu0 %v722
  %v1024 = vpop.f32.mrf.mxu0
  %v1025 = vadd.f32 0.0, %v1024
  %1026 = vmatmul.f32.gmra.mxu0 %v723
  %v1027 = vpop.f32.mrf.mxu0
  %v1028 = vadd.f32 0.0, %v1027
  %1029 = vmatmul.f32.gmra.mxu0 %v724
  %v1030 = vpop.f32.mrf.mxu0
  %v1031 = vadd.f32 0.0, %v1030
  %1032 = vmatmul.f32.gmra.mxu0 %v725
  %v1033 = vpop.f32.mrf.mxu0
  %v1034 = vadd.f32 0.0, %v1033
  %1035 = vdwg.mxu0
  %1036 = vmatpush.msra.mxu0 %v791
  %1037 = vmatpush.msra.mxu0 %v789
  %1038 = vmatpush.msra.mxu0 %v787
  %1039 = vmatpush.msra.mxu0 %v785
  %1040 = vmatpush.msra.mxu0 %v783
  %1041 = vmatpush.msra.mxu0 %v781
  %1042 = vmatpush.msra.mxu0 %v779
  %1043 = vmatpush.msra.mxu0 %v777
  %1044 = vmatpush.msra.mxu0 %v775
  %1045 = vmatpush.msra.mxu0 %v773
  %1046 = vmatpush.msra.mxu0 %v771
  %1047 = vmatpush.msra.mxu0 %v769
  %1048 = vmatpush.msra.mxu0 %v767
  %1049 = vmatpush.msra.mxu0 %v765
  %1050 = vmatpush.msra.mxu0 %v763
  %1051 = vmatpush.msra.mxu0 %v761
  %1052 = vmatmul.f32.gmra.mxu0 %v715
  %v1053 = vpop.f32.mrf.mxu0
  %v1054 = vadd.f32 %v1001, %v1053
  %1055 = vmatmul.f32.gmra.mxu0 %v716
  %v1056 = vpop.f32.mrf.mxu0
  %v1057 = vadd.f32 %v1004, %v1056
  %1058 = vmatmul.f32.gmra.mxu0 %v717
  %v1059 = vpop.f32.mrf.mxu0
  %v1060 = vadd.f32 %v1007, %v1059
  %1061 = vmatmul.f32.gmra.mxu0 %v718
  %v1062 = vpop.f32.mrf.mxu0
  %v1063 = vadd.f32 %v1010, %v1062
  %1064 = vmatmul.f32.gmra.mxu0 %v719
  %v1065 = vpop.f32.mrf.mxu0
  %v1066 = vadd.f32 %v1013, %v1065
  %1067 = vmatmul.f32.gmra.mxu0 %v720
  %v1068 = vpop.f32.mrf.mxu0
  %v1069 = vadd.f32 %v1016, %v1068
  %1070 = vmatmul.f32.gmra.mxu0 %v721
  %v1071 = vpop.f32.mrf.mxu0
  %v1072 = vadd.f32 %v1019, %v1071
  %1073 = vmatmul.f32.gmra.mxu0 %v722
  %v1074 = vpop.f32.mrf.mxu0
  %v1075 = vadd.f32 %v1022, %v1074
  %1076 = vmatmul.f32.gmra.mxu0 %v723
  %v1077 = vpop.f32.mrf.mxu0
  %v1078 = vadd.f32 %v1025, %v1077
  %1079 = vmatmul.f32.gmra.mxu0 %v724
  %v1080 = vpop.f32.mrf.mxu0
  %v1081 = vadd.f32 %v1028, %v1080
  %1082 = vmatmul.f32.gmra.mxu0 %v725
  %v1083 = vpop.f32.mrf.mxu0
  %v1084 = vadd.f32 %v1031, %v1083
  %1085 = vmatmul.f32.gmra.mxu0 %v726
  %v1086 = vpop.f32.mrf.mxu0
  %v1087 = vadd.f32 %v1034, %v1086
  %1088 = vdwg.mxu0
  %1089 = vmatpush.msra.mxu0 %v823
  %1090 = vmatpush.msra.mxu0 %v821
  %1091 = vmatpush.msra.mxu0 %v819
  %1092 = vmatpush.msra.mxu0 %v817
  %1093 = vmatpush.msra.mxu0 %v815
  %1094 = vmatpush.msra.mxu0 %v813
  %1095 = vmatpush.msra.mxu0 %v811
  %1096 = vmatpush.msra.mxu0 %v809
  %1097 = vmatpush.msra.mxu0 %v807
  %1098 = vmatpush.msra.mxu0 %v805
  %1099 = vmatpush.msra.mxu0 %v803
  %1100 = vmatpush.msra.mxu0 %v801
  %1101 = vmatpush.msra.mxu0 %v799
  %1102 = vmatpush.msra.mxu0 %v797
  %1103 = vmatpush.msra.mxu0 %v795
  %1104 = vmatpush.msra.mxu0 %v793
  %1105 = vmatmul.f32.gmra.mxu0 %v716
  %v1106 = vpop.f32.mrf.mxu0
  %v1107 = vadd.f32 %v1054, %v1106
  %1108 = vmatmul.f32.gmra.mxu0 %v717
  %v1109 = vpop.f32.mrf.mxu0
  %v1110 = vadd.f32 %v1057, %v1109
  %1111 = vmatmul.f32.gmra.mxu0 %v718
  %v1112 = vpop.f32.mrf.mxu0
  %v1113 = vadd.f32 %v1060, %v1112
  %1114 = vmatmul.f32.gmra.mxu0 %v719
  %v1115 = vpop.f32.mrf.mxu0
  %v1116 = vadd.f32 %v1063, %v1115
  %1117 = vmatmul.f32.gmra.mxu0 %v720
  %v1118 = vpop.f32.mrf.mxu0
  %v1119 = vadd.f32 %v1066, %v1118
  %1120 = vmatmul.f32.gmra.mxu0 %v721
  %v1121 = vpop.f32.mrf.mxu0
  %v1122 = vadd.f32 %v1069, %v1121
  %1123 = vmatmul.f32.gmra.mxu0 %v722
  %v1124 = vpop.f32.mrf.mxu0
  %v1125 = vadd.f32 %v1072, %v1124
  %1126 = vmatmul.f32.gmra.mxu0 %v723
  %v1127 = vpop.f32.mrf.mxu0
  %v1128 = vadd.f32 %v1075, %v1127
  %1129 = vmatmul.f32.gmra.mxu0 %v724
  %v1130 = vpop.f32.mrf.mxu0
  %v1131 = vadd.f32 %v1078, %v1130
  %1132 = vmatmul.f32.gmra.mxu0 %v725
  %v1133 = vpop.f32.mrf.mxu0
  %v1134 = vadd.f32 %v1081, %v1133
  %1135 = vmatmul.f32.gmra.mxu0 %v726
  %v1136 = vpop.f32.mrf.mxu0
  %v1137 = vadd.f32 %v1084, %v1136
  %1138 = vmatmul.f32.gmra.mxu0 %v727
  %v1139 = vpop.f32.mrf.mxu0
  %v1140 = vadd.f32 %v1087, %v1139
  %1141 = vdwg.mxu0
  %v1142 = vmax.f32 %v948, %v1107
  %v1143 = vmax.f32 %v951, %v1110
  %v1144 = vmax.f32 %v954, %v1113
  %v1145 = vmax.f32 %v957, %v1116
  %v1146 = vmax.f32 %v960, %v1119
  %v1147 = vmax.f32 %v963, %v1122
  %v1148 = vmax.f32 %v966, %v1125
  %v1149 = vmax.f32 %v969, %v1128
  %v1150 = vmax.f32 %v972, %v1131
  %v1151 = vmax.f32 %v975, %v1134
  %v1152 = vmax.f32 %v978, %v1137
  %v1153 = vmax.f32 %v981, %v1140
  %v1154 = vld [vmem:[%s4] sm:$0x1]
  %v1156 = vperm.slane %v1154, 0
  %v1158 = vadd.f32 %v1142, %v1156
  %v1159 = vadd.f32 %v1143, %v1156
  %v1160 = vadd.f32 %v1144, %v1156
  %v1161 = vadd.f32 %v1145, %v1156
  %v1162 = vadd.f32 %v1146, %v1156
  %v1163 = vadd.f32 %v1147, %v1156
  %v1164 = vadd.f32 %v1148, %v1156
  %v1165 = vadd.f32 %v1149, %v1156
  %v1166 = vadd.f32 %v1150, %v1156
  %v1167 = vadd.f32 %v1151, %v1156
  %v1168 = vadd.f32 %v1152, %v1156
  %v1169 = vadd.f32 %v1153, %v1156
  %v1170 = vmax.f32 %v1158, 0.0
  %v1171 = vmax.f32 %v1159, 0.0
  %v1172 = vmax.f32 %v1160, 0.0
  %v1173 = vmax.f32 %v1161, 0.0
  %v1174 = vmax.f32 %v1162, 0.0
  %v1175 = vmax.f32 %v1163, 0.0
  %v1176 = vmax.f32 %v1164, 0.0
  %v1177 = vmax.f32 %v1165, 0.0
  %v1178 = vmax.f32 %v1166, 0.0
  %v1179 = vmax.f32 %v1167, 0.0
  %v1180 = vmax.f32 %v1168, 0.0
  %v1181 = vmax.f32 %v1169, 0.0
  %v1182 = vmax.f32 %v1170, %v1171
  %v1183 = vmax.f32 %v1172, %v1173
  %v1184 = vmax.f32 %v1174, %v1175
  %v1185 = vmax.f32 %v1176, %v1177
  %v1186 = vmax.f32 %v1178, %v1179
  %v1187 = vmax.f32 %v1180, %v1181
  %v1188 = vld [vmem:[%s5] sm:$0xff]
  %v1189 = vld [vmem:[%s5 + $0x8] sm:$0xff]
  %v1190 = vld [vmem:[%s5 + $0x10] sm:$0xff]
  %v1191 = vld [vmem:[%s5 + $0x18] sm:$0xff]
  %v1192 = vld [vmem:[%s5 + $0x20] sm:$0xff]
  %v1193 = vld [vmem:[%s5 + $0x28] sm:$0xff]
  %v1194 = vld [vmem:[%s5 + $0x30] sm:$0xff]
  %v1195 = vld [vmem:[%s5 + $0x38] sm:$0xff]
  %v1196 = vld [vmem:[%s5 + $0x40] sm:$0xff]
  %v1197 = vld [vmem:[%s5 + $0x48] sm:$0xff]
  %v1198 = vld [vmem:[%s5 + $0x50] sm:$0xff]
  %v1199 = vld [vmem:[%s5 + $0x58] sm:$0xff]
  %v1200 = vld [vmem:[%s5 + $0x60] sm:$0xff]
  %v1201 = vld [vmem:[%s5 + $0x68] sm:$0xff]
  %v1202 = vld [vmem:[%s5 + $0x70] sm:$0xff]
  %v1203 = vld [vmem:[%s5 + $0x78] sm:$0xff]
  %v1204 = vld [vmem:[%s5 + $0x80] sm:$0xff]
  %v1205 = vld [vmem:[%s5 + $0x88] sm:$0xff]
  %v1206 = vld [vmem:[%s5 + $0x90] sm:$0xff]
  %v1207 = vld [vmem:[%s5 + $0x98] sm:$0xff]
  %v1208 = vld [vmem:[%s5 + $0xa0] sm:$0xff]
  %v1209 = vld [vmem:[%s5 + $0xa8] sm:$0xff]
  %v1210 = vld [vmem:[%s5 + $0xb0] sm:$0xff]
  %v1211 = vld [vmem:[%s5 + $0xb8] sm:$0xff]
  %v1212 = vld [vmem:[%s5 + $0xc0] sm:$0xff]
  %v1213 = vld [vmem:[%s5 + $0xc8] sm:$0xff]
  %v1214 = vld [vmem:[%s5 + $0xd0] sm:$0xff]
  %v1215 = vld [vmem:[%s5 + $0xd8] sm:$0xff]
  %v1216 = vld [vmem:[%s5 + $0xe0] sm:$0xff]
  %v1217 = vld [vmem:[%s5 + $0xe8] sm:$0xff]
  %v1218 = vld [vmem:[%s5 + $0xf0] sm:$0xff]
  %v1219 = vld [vmem:[%s5 + $0xf8] sm:$0xff]
  %v1220 = vld [vmem:[%s5 + $0x100] sm:$0xff]
  %v1221 = vld [vmem:[%s5 + $0x108] sm:$0xff]
  %v1222 = vld [vmem:[%s5 + $0x110] sm:$0xff]
  %v1223 = vld [vmem:[%s5 + $0x118] sm:$0xff]
  %v1224 = vld [vmem:[%s5 + $0x120] sm:$0xff]
  %v1225 = vld [vmem:[%s5 + $0x128] sm:$0xff]
  %v1226 = vld [vmem:[%s5 + $0x130] sm:$0xff]
  %v1227 = vld [vmem:[%s5 + $0x138] sm:$0xff]
  %v1228 = vld [vmem:[%s5 + $0x140] sm:$0xff]
  %v1229 = vld [vmem:[%s5 + $0x148] sm:$0xff]
  %v1230 = vld [vmem:[%s5 + $0x150] sm:$0xff]
  %v1231 = vld [vmem:[%s5 + $0x158] sm:$0xff]
  %v1232 = vld [vmem:[%s5 + $0x160] sm:$0xff]
  %v1233 = vld [vmem:[%s5 + $0x168] sm:$0xff]
  %v1234 = vld [vmem:[%s5 + $0x170] sm:$0xff]
  %v1235 = vld [vmem:[%s5 + $0x178] sm:$0xff]
  %v1236 = vld [vmem:[%s5 + $0x180] sm:$0xff]
  %v1237 = vld [vmem:[%s5 + $0x188] sm:$0xff]
  %v1238 = vld [vmem:[%s5 + $0x190] sm:$0xff]
  %v1239 = vld [vmem:[%s5 + $0x198] sm:$0xff]
  %v1240 = vld [vmem:[%s5 + $0x1a0] sm:$0xff]
  %v1241 = vld [vmem:[%s5 + $0x1a8] sm:$0xff]
  %v1242 = vld [vmem:[%s5 + $0x1b0] sm:$0xff]
  %v1243 = vld [vmem:[%s5 + $0x1b8] sm:$0xff]
  %v1244 = vld [vmem:[%s5 + $0x1c0] sm:$0xff]
  %v1245 = vld [vmem:[%s5 + $0x1c8] sm:$0xff]
  %v1246 = vld [vmem:[%s5 + $0x1d0] sm:$0xff]
  %v1247 = vld [vmem:[%s5 + $0x1d8] sm:$0xff]
  %v1248 = vld [vmem:[%s5 + $0x1e0] sm:$0xff]
  %v1249 = vld [vmem:[%s5 + $0x1e8] sm:$0xff]
  %v1250 = vld [vmem:[%s5 + $0x1f0] sm:$0xff]
  %v1251 = vld [vmem:[%s5 + $0x1f8] sm:$0xff]
  %v1252 = vld [vmem:[%s5 + $0x200] sm:$0xff]
  %v1253 = vld [vmem:[%s5 + $0x208] sm:$0xff]
  %v1254 = vld [vmem:[%s5 + $0x210] sm:$0xff]
  %v1255 = vld [vmem:[%s5 + $0x218] sm:$0xff]
  %v1256 = vld [vmem:[%s5 + $0x220] sm:$0xff]
  %v1257 = vld [vmem:[%s5 + $0x228] sm:$0xff]
  %v1258 = vld [vmem:[%s5 + $0x230] sm:$0xff]
  %v1259 = vld [vmem:[%s5 + $0x238] sm:$0xff]
  %v1260 = vld [vmem:[%s5 + $0x240] sm:$0xff]
  %v1261 = vld [vmem:[%s5 + $0x248] sm:$0xff]
  %v1262 = vld [vmem:[%s5 + $0x250] sm:$0xff]
  %v1263 = vld [vmem:[%s5 + $0x258] sm:$0xff]
  %v1264 = vld [vmem:[%s5 + $0x260] sm:$0xff]
  %v1265 = vld [vmem:[%s5 + $0x268] sm:$0xff]
  %v1266 = vld [vmem:[%s5 + $0x270] sm:$0xff]
  %v1267 = vld [vmem:[%s5 + $0x278] sm:$0xff]
  %v1268 = vld [vmem:[%s5 + $0x280] sm:$0xff]
  %v1269 = vld [vmem:[%s5 + $0x288] sm:$0xff]
  %v1270 = vld [vmem:[%s5 + $0x290] sm:$0xff]
  %v1271 = vld [vmem:[%s5 + $0x298] sm:$0xff]
  %v1272 = vld [vmem:[%s5 + $0x2a0] sm:$0xff]
  %v1273 = vld [vmem:[%s5 + $0x2a8] sm:$0xff]
  %v1274 = vld [vmem:[%s5 + $0x2b0] sm:$0xff]
  %v1275 = vld [vmem:[%s5 + $0x2b8] sm:$0xff]
  %v1276 = vld [vmem:[%s5 + $0x2c0] sm:$0xff]
  %v1277 = vld [vmem:[%s5 + $0x2c8] sm:$0xff]
  %v1278 = vld [vmem:[%s5 + $0x2d0] sm:$0xff]
  %v1279 = vld [vmem:[%s5 + $0x2d8] sm:$0xff]
  %v1280 = vld [vmem:[%s5 + $0x2e0] sm:$0xff]
  %v1281 = vld [vmem:[%s5 + $0x2e8] sm:$0xff]
  %v1282 = vld [vmem:[%s5 + $0x2f0] sm:$0xff]
  %v1283 = vld [vmem:[%s5 + $0x2f8] sm:$0xff]
  %v1284 = vld [vmem:[%s5 + $0x300] sm:$0xff]
  %v1285 = vld [vmem:[%s5 + $0x308] sm:$0xff]
  %v1286 = vld [vmem:[%s5 + $0x310] sm:$0xff]
  %v1287 = vld [vmem:[%s5 + $0x318] sm:$0xff]
  %v1288 = vld [vmem:[%s5 + $0x320] sm:$0xff]
  %v1289 = vld [vmem:[%s5 + $0x328] sm:$0xff]
  %v1290 = vld [vmem:[%s5 + $0x330] sm:$0xff]
  %v1291 = vld [vmem:[%s5 + $0x338] sm:$0xff]
  %v1292 = vld [vmem:[%s5 + $0x340] sm:$0xff]
  %v1293 = vld [vmem:[%s5 + $0x348] sm:$0xff]
  %v1294 = vld [vmem:[%s5 + $0x350] sm:$0xff]
  %v1295 = vld [vmem:[%s5 + $0x358] sm:$0xff]
  %v1296 = vld [vmem:[%s5 + $0x360] sm:$0xff]
  %v1297 = vld [vmem:[%s5 + $0x368] sm:$0xff]
  %v1298 = vld [vmem:[%s5 + $0x370] sm:$0xff]
  %v1299 = vld [vmem:[%s5 + $0x378] sm:$0xff]
  %v1300 = vld [vmem:[%s5 + $0x380] sm:$0xff]
  %v1301 = vld [vmem:[%s5 + $0x388] sm:$0xff]
  %v1302 = vld [vmem:[%s5 + $0x390] sm:$0xff]
  %v1303 = vld [vmem:[%s5 + $0x398] sm:$0xff]
  %v1304 = vld [vmem:[%s5 + $0x3a0] sm:$0xff]
  %v1305 = vld [vmem:[%s5 + $0x3a8] sm:$0xff]
  %v1306 = vld [vmem:[%s5 + $0x3b0] sm:$0xff]
  %v1307 = vld [vmem:[%s5 + $0x3b8] sm:$0xff]
  %v1308 = vld [vmem:[%s5 + $0x3c0] sm:$0xff]
  %v1309 = vld [vmem:[%s5 + $0x3c8] sm:$0xff]
  %v1310 = vld [vmem:[%s5 + $0x3d0] sm:$0xff]
  %v1311 = vld [vmem:[%s5 + $0x3d8] sm:$0xff]
  %v1312 = vld [vmem:[%s5 + $0x3e0] sm:$0xff]
  %v1313 = vld [vmem:[%s5 + $0x3e8] sm:$0xff]
  %v1314 = vld [vmem:[%s5 + $0x3f0] sm:$0xff]
  %v1315 = vld [vmem:[%s5 + $0x3f8] sm:$0xff]
  %v1316 = vld [vmem:[%s5 + $0x400] sm:$0xff]
  %v1317 = vld [vmem:[%s5 + $0x408] sm:$0xff]
  %v1318 = vld [vmem:[%s5 + $0x410] sm:$0xff]
  %v1319 = vld [vmem:[%s5 + $0x418] sm:$0xff]
  %v1320 = vld [vmem:[%s5 + $0x420] sm:$0xff]
  %v1321 = vld [vmem:[%s5 + $0x428] sm:$0xff]
  %v1322 = vld [vmem:[%s5 + $0x430] sm:$0xff]
  %v1323 = vld [vmem:[%s5 + $0x438] sm:$0xff]
  %v1324 = vld [vmem:[%s5 + $0x440] sm:$0xff]
  %v1325 = vld [vmem:[%s5 + $0x448] sm:$0xff]
  %v1326 = vld [vmem:[%s5 + $0x450] sm:$0xff]
  %v1327 = vld [vmem:[%s5 + $0x458] sm:$0xff]
  %v1328 = vld [vmem:[%s5 + $0x460] sm:$0xff]
  %v1329 = vld [vmem:[%s5 + $0x468] sm:$0xff]
  %v1330 = vld [vmem:[%s5 + $0x470] sm:$0xff]
  %v1331 = vld [vmem:[%s5 + $0x478] sm:$0xff]
  %v1332 = vld [vmem:[%s5 + $0x480] sm:$0xff]
  %v1333 = vld [vmem:[%s5 + $0x488] sm:$0xff]
  %v1334 = vld [vmem:[%s5 + $0x490] sm:$0xff]
  %v1335 = vld [vmem:[%s5 + $0x498] sm:$0xff]
  %v1336 = vld [vmem:[%s5 + $0x4a0] sm:$0xff]
  %v1337 = vld [vmem:[%s5 + $0x4a8] sm:$0xff]
  %v1338 = vld [vmem:[%s5 + $0x4b0] sm:$0xff]
  %v1339 = vld [vmem:[%s5 + $0x4b8] sm:$0xff]
  %v1340 = vld [vmem:[%s5 + $0x4c0] sm:$0xff]
  %v1341 = vld [vmem:[%s5 + $0x4c8] sm:$0xff]
  %v1342 = vld [vmem:[%s5 + $0x4d0] sm:$0xff]
  %v1343 = vld [vmem:[%s5 + $0x4d8] sm:$0xff]
  %v1344 = vld [vmem:[%s5 + $0x4e0] sm:$0xff]
  %v1345 = vld [vmem:[%s5 + $0x4e8] sm:$0xff]
  %v1346 = vld [vmem:[%s5 + $0x4f0] sm:$0xff]
  %v1347 = vld [vmem:[%s5 + $0x4f8] sm:$0xff]
  %v1348 = vld [vmem:[%s5 + $0x500] sm:$0xff]
  %v1349 = vld [vmem:[%s5 + $0x508] sm:$0xff]
  %v1350 = vld [vmem:[%s5 + $0x510] sm:$0xff]
  %v1351 = vld [vmem:[%s5 + $0x518] sm:$0xff]
  %v1352 = vld [vmem:[%s5 + $0x520] sm:$0xff]
  %v1353 = vld [vmem:[%s5 + $0x528] sm:$0xff]
  %v1354 = vld [vmem:[%s5 + $0x530] sm:$0xff]
  %v1355 = vld [vmem:[%s5 + $0x538] sm:$0xff]
  %v1356 = vld [vmem:[%s5 + $0x540] sm:$0xff]
  %v1357 = vld [vmem:[%s5 + $0x548] sm:$0xff]
  %v1358 = vld [vmem:[%s5 + $0x550] sm:$0xff]
  %v1359 = vld [vmem:[%s5 + $0x558] sm:$0xff]
  %v1360 = vld [vmem:[%s5 + $0x560] sm:$0xff]
  %v1361 = vld [vmem:[%s5 + $0x568] sm:$0xff]
  %v1362 = vld [vmem:[%s5 + $0x570] sm:$0xff]
  %v1363 = vld [vmem:[%s5 + $0x578] sm:$0xff]
  %v1364 = vld [vmem:[%s5 + $0x580] sm:$0xff]
  %v1365 = vld [vmem:[%s5 + $0x588] sm:$0xff]
  %v1366 = vld [vmem:[%s5 + $0x590] sm:$0xff]
  %v1367 = vld [vmem:[%s5 + $0x598] sm:$0xff]
  %v1368 = vld [vmem:[%s5 + $0x5a0] sm:$0xff]
  %v1369 = vld [vmem:[%s5 + $0x5a8] sm:$0xff]
  %v1370 = vld [vmem:[%s5 + $0x5b0] sm:$0xff]
  %v1371 = vld [vmem:[%s5 + $0x5b8] sm:$0xff]
  %v1372 = vld [vmem:[%s5 + $0x5c0] sm:$0xff]
  %v1373 = vld [vmem:[%s5 + $0x5c8] sm:$0xff]
  %v1374 = vld [vmem:[%s5 + $0x5d0] sm:$0xff]
  %v1375 = vld [vmem:[%s5 + $0x5d8] sm:$0xff]
  %v1376 = vld [vmem:[%s5 + $0x5e0] sm:$0xff]
  %v1377 = vld [vmem:[%s5 + $0x5e8] sm:$0xff]
  %v1378 = vld [vmem:[%s5 + $0x5f0] sm:$0xff]
  %v1379 = vld [vmem:[%s5 + $0x5f8] sm:$0xff]
  %v1380 = vld [vmem:[%s5 + $0x600] sm:$0xff]
  %v1381 = vld [vmem:[%s5 + $0x608] sm:$0xff]
  %v1382 = vld [vmem:[%s5 + $0x610] sm:$0xff]
  %v1383 = vld [vmem:[%s5 + $0x618] sm:$0xff]
  %v1384 = vld [vmem:[%s5 + $0x620] sm:$0xff]
  %v1385 = vld [vmem:[%s5 + $0x628] sm:$0xff]
  %v1386 = vld [vmem:[%s5 + $0x630] sm:$0xff]
  %v1387 = vld [vmem:[%s5 + $0x638] sm:$0xff]
  %v1388 = vld [vmem:[%s5 + $0x640] sm:$0xff]
  %v1389 = vld [vmem:[%s5 + $0x648] sm:$0xff]
  %v1390 = vld [vmem:[%s5 + $0x650] sm:$0xff]
  %v1391 = vld [vmem:[%s5 + $0x658] sm:$0xff]
  %v1392 = vld [vmem:[%s5 + $0x660] sm:$0xff]
  %v1393 = vld [vmem:[%s5 + $0x668] sm:$0xff]
  %v1394 = vld [vmem:[%s5 + $0x670] sm:$0xff]
  %v1395 = vld [vmem:[%s5 + $0x678] sm:$0xff]
  %v1396 = vld [vmem:[%s5 + $0x680] sm:$0xff]
  %v1397 = vld [vmem:[%s5 + $0x688] sm:$0xff]
  %v1398 = vld [vmem:[%s5 + $0x690] sm:$0xff]
  %v1399 = vld [vmem:[%s5 + $0x698] sm:$0xff]
  %v1400 = vld [vmem:[%s5 + $0x6a0] sm:$0xff]
  %v1401 = vld [vmem:[%s5 + $0x6a8] sm:$0xff]
  %v1402 = vld [vmem:[%s5 + $0x6b0] sm:$0xff]
  %v1403 = vld [vmem:[%s5 + $0x6b8] sm:$0xff]
  %v1404 = vld [vmem:[%s5 + $0x6c0] sm:$0xff]
  %v1405 = vld [vmem:[%s5 + $0x6c8] sm:$0xff]
  %v1406 = vld [vmem:[%s5 + $0x6d0] sm:$0xff]
  %v1407 = vld [vmem:[%s5 + $0x6d8] sm:$0xff]
  %v1408 = vld [vmem:[%s5 + $0x6e0] sm:$0xff]
  %v1409 = vld [vmem:[%s5 + $0x6e8] sm:$0xff]
  %v1410 = vld [vmem:[%s5 + $0x6f0] sm:$0xff]
  %v1411 = vld [vmem:[%s5 + $0x6f8] sm:$0xff]
  %v1412 = vld [vmem:[%s5 + $0x700] sm:$0xff]
  %v1413 = vld [vmem:[%s5 + $0x708] sm:$0xff]
  %v1414 = vld [vmem:[%s5 + $0x710] sm:$0xff]
  %v1415 = vld [vmem:[%s5 + $0x718] sm:$0xff]
  %v1416 = vld [vmem:[%s5 + $0x720] sm:$0xff]
  %v1417 = vld [vmem:[%s5 + $0x728] sm:$0xff]
  %v1418 = vld [vmem:[%s5 + $0x730] sm:$0xff]
  %v1419 = vld [vmem:[%s5 + $0x738] sm:$0xff]
  %v1420 = vld [vmem:[%s5 + $0x740] sm:$0xff]
  %v1421 = vld [vmem:[%s5 + $0x748] sm:$0xff]
  %v1422 = vld [vmem:[%s5 + $0x750] sm:$0xff]
  %v1423 = vld [vmem:[%s5 + $0x758] sm:$0xff]
  %v1424 = vld [vmem:[%s5 + $0x760] sm:$0xff]
  %v1425 = vld [vmem:[%s5 + $0x768] sm:$0xff]
  %v1426 = vld [vmem:[%s5 + $0x770] sm:$0xff]
  %v1427 = vld [vmem:[%s5 + $0x778] sm:$0xff]
  %v1428 = vld [vmem:[%s5 + $0x780] sm:$0xff]
  %v1429 = vld [vmem:[%s5 + $0x788] sm:$0xff]
  %v1430 = vld [vmem:[%s5 + $0x790] sm:$0xff]
  %v1431 = vld [vmem:[%s5 + $0x798] sm:$0xff]
  %v1432 = vld [vmem:[%s5 + $0x7a0] sm:$0xff]
  %v1433 = vld [vmem:[%s5 + $0x7a8] sm:$0xff]
  %v1434 = vld [vmem:[%s5 + $0x7b0] sm:$0xff]
  %v1435 = vld [vmem:[%s5 + $0x7b8] sm:$0xff]
  %v1436 = vld [vmem:[%s5 + $0x7c0] sm:$0xff]
  %v1437 = vld [vmem:[%s5 + $0x7c8] sm:$0xff]
  %v1438 = vld [vmem:[%s5 + $0x7d0] sm:$0xff]
  %v1439 = vld [vmem:[%s5 + $0x7d8] sm:$0xff]
  %v1440 = vld [vmem:[%s5 + $0x7e0] sm:$0xff]
  %v1441 = vld [vmem:[%s5 + $0x7e8] sm:$0xff]
  %v1442 = vld [vmem:[%s5 + $0x7f0] sm:$0xff]
  %v1443 = vld [vmem:[%s5 + $0x7f8] sm:$0xff]
  %v1444 = vld [vmem:[%s5 + $0x800] sm:$0xff]
  %v1445 = vld [vmem:[%s5 + $0x808] sm:$0xff]
  %v1446 = vld [vmem:[%s5 + $0x810] sm:$0xff]
  %v1447 = vld [vmem:[%s5 + $0x818] sm:$0xff]
  %v1448 = vld [vmem:[%s5 + $0x820] sm:$0xff]
  %v1449 = vld [vmem:[%s5 + $0x828] sm:$0xff]
  %v1450 = vld [vmem:[%s5 + $0x830] sm:$0xff]
  %v1451 = vld [vmem:[%s5 + $0x838] sm:$0xff]
  %v1452 = vld [vmem:[%s5 + $0x840] sm:$0xff]
  %v1453 = vld [vmem:[%s5 + $0x848] sm:$0xff]
  %v1454 = vld [vmem:[%s5 + $0x850] sm:$0xff]
  %v1455 = vld [vmem:[%s5 + $0x858] sm:$0xff]
  %v1456 = vld [vmem:[%s5 + $0x860] sm:$0xff]
  %v1457 = vld [vmem:[%s5 + $0x868] sm:$0xff]
  %v1458 = vld [vmem:[%s5 + $0x870] sm:$0xff]
  %v1459 = vld [vmem:[%s5 + $0x878] sm:$0xff]
  %v1460 = vld [vmem:[%s5 + $0x880] sm:$0xff]
  %v1461 = vld [vmem:[%s5 + $0x888] sm:$0xff]
  %v1462 = vld [vmem:[%s5 + $0x890] sm:$0xff]
  %v1463 = vld [vmem:[%s5 + $0x898] sm:$0xff]
  %v1464 = vld [vmem:[%s5 + $0x8a0] sm:$0xff]
  %v1465 = vld [vmem:[%s5 + $0x8a8] sm:$0xff]
  %v1466 = vld [vmem:[%s5 + $0x8b0] sm:$0xff]
  %v1467 = vld [vmem:[%s5 + $0x8b8] sm:$0xff]
  %v1468 = vld [vmem:[%s5 + $0x8c0] sm:$0xff]
  %v1469 = vld [vmem:[%s5 + $0x8c8] sm:$0xff]
  %v1470 = vld [vmem:[%s5 + $0x8d0] sm:$0xff]
  %v1471 = vld [vmem:[%s5 + $0x8d8] sm:$0xff]
  %v1472 = vld [vmem:[%s5 + $0x8e0] sm:$0xff]
  %v1473 = vld [vmem:[%s5 + $0x8e8] sm:$0xff]
  %v1474 = vld [vmem:[%s5 + $0x8f0] sm:$0xff]
  %v1475 = vld [vmem:[%s5 + $0x8f8] sm:$0xff]
  %v1476 = vld [vmem:[%s5 + $0x900] sm:$0xff]
  %v1477 = vld [vmem:[%s5 + $0x908] sm:$0xff]
  %v1478 = vld [vmem:[%s5 + $0x910] sm:$0xff]
  %v1479 = vld [vmem:[%s5 + $0x918] sm:$0xff]
  %v1480 = vld [vmem:[%s5 + $0x920] sm:$0xff]
  %v1481 = vld [vmem:[%s5 + $0x928] sm:$0xff]
  %v1482 = vld [vmem:[%s5 + $0x930] sm:$0xff]
  %v1483 = vld [vmem:[%s5 + $0x938] sm:$0xff]
  %v1484 = vld [vmem:[%s5 + $0x940] sm:$0xff]
  %v1485 = vld [vmem:[%s5 + $0x948] sm:$0xff]
  %v1486 = vld [vmem:[%s5 + $0x950] sm:$0xff]
  %v1487 = vld [vmem:[%s5 + $0x958] sm:$0xff]
  %v1488 = vld [vmem:[%s5 + $0x960] sm:$0xff]
  %v1489 = vld [vmem:[%s5 + $0x968] sm:$0xff]
  %v1490 = vld [vmem:[%s5 + $0x970] sm:$0xff]
  %v1491 = vld [vmem:[%s5 + $0x978] sm:$0xff]
  %v1492 = vld [vmem:[%s5 + $0x980] sm:$0xff]
  %v1493 = vld [vmem:[%s5 + $0x988] sm:$0xff]
  %v1494 = vld [vmem:[%s5 + $0x990] sm:$0xff]
  %v1495 = vld [vmem:[%s5 + $0x998] sm:$0xff]
  %v1496 = vld [vmem:[%s5 + $0x9a0] sm:$0xff]
  %v1497 = vld [vmem:[%s5 + $0x9a8] sm:$0xff]
  %v1498 = vld [vmem:[%s5 + $0x9b0] sm:$0xff]
  %v1499 = vld [vmem:[%s5 + $0x9b8] sm:$0xff]
  %v1500 = vld [vmem:[%s5 + $0x9c0] sm:$0xff]
  %v1501 = vld [vmem:[%s5 + $0x9c8] sm:$0xff]
  %v1502 = vld [vmem:[%s5 + $0x9d0] sm:$0xff]
  %v1503 = vld [vmem:[%s5 + $0x9d8] sm:$0xff]
  %v1504 = vld [vmem:[%s5 + $0x9e0] sm:$0xff]
  %v1505 = vld [vmem:[%s5 + $0x9e8] sm:$0xff]
  %v1506 = vld [vmem:[%s5 + $0x9f0] sm:$0xff]
  %v1507 = vld [vmem:[%s5 + $0x9f8] sm:$0xff]
  %v1508 = vld [vmem:[%s5 + $0xa00] sm:$0xff]
  %v1509 = vld [vmem:[%s5 + $0xa08] sm:$0xff]
  %v1510 = vld [vmem:[%s5 + $0xa10] sm:$0xff]
  %v1511 = vld [vmem:[%s5 + $0xa18] sm:$0xff]
  %v1512 = vld [vmem:[%s5 + $0xa20] sm:$0xff]
  %v1513 = vld [vmem:[%s5 + $0xa28] sm:$0xff]
  %v1514 = vld [vmem:[%s5 + $0xa30] sm:$0xff]
  %v1515 = vld [vmem:[%s5 + $0xa38] sm:$0xff]
  %v1516 = vld [vmem:[%s5 + $0xa40] sm:$0xff]
  %v1517 = vld [vmem:[%s5 + $0xa48] sm:$0xff]
  %v1518 = vld [vmem:[%s5 + $0xa50] sm:$0xff]
  %v1519 = vld [vmem:[%s5 + $0xa58] sm:$0xff]
  %v1520 = vld [vmem:[%s5 + $0xa60] sm:$0xff]
  %v1521 = vld [vmem:[%s5 + $0xa68] sm:$0xff]
  %v1522 = vld [vmem:[%s5 + $0xa70] sm:$0xff]
  %v1523 = vld [vmem:[%s5 + $0xa78] sm:$0xff]
  %v1524 = vld [vmem:[%s5 + $0xa80] sm:$0xff]
  %v1525 = vld [vmem:[%s5 + $0xa88] sm:$0xff]
  %v1526 = vld [vmem:[%s5 + $0xa90] sm:$0xff]
  %v1527 = vld [vmem:[%s5 + $0xa98] sm:$0xff]
  %v1528 = vld [vmem:[%s5 + $0xaa0] sm:$0xff]
  %v1529 = vld [vmem:[%s5 + $0xaa8] sm:$0xff]
  %v1530 = vld [vmem:[%s5 + $0xab0] sm:$0xff]
  %v1531 = vld [vmem:[%s5 + $0xab8] sm:$0xff]
  %v1532 = vld [vmem:[%s5 + $0xac0] sm:$0xff]
  %v1533 = vld [vmem:[%s5 + $0xac8] sm:$0xff]
  %v1534 = vld [vmem:[%s5 + $0xad0] sm:$0xff]
  %v1535 = vld [vmem:[%s5 + $0xad8] sm:$0xff]
  %v1536 = vld [vmem:[%s5 + $0xae0] sm:$0xff]
  %v1537 = vld [vmem:[%s5 + $0xae8] sm:$0xff]
  %v1538 = vld [vmem:[%s5 + $0xaf0] sm:$0xff]
  %v1539 = vld [vmem:[%s5 + $0xaf8] sm:$0xff]
  %v1540 = vld [vmem:[%s5 + $0xb00] sm:$0xff]
  %v1541 = vld [vmem:[%s5 + $0xb08] sm:$0xff]
  %v1542 = vld [vmem:[%s5 + $0xb10] sm:$0xff]
  %v1543 = vld [vmem:[%s5 + $0xb18] sm:$0xff]
  %v1544 = vld [vmem:[%s5 + $0xb20] sm:$0xff]
  %v1545 = vld [vmem:[%s5 + $0xb28] sm:$0xff]
  %v1546 = vld [vmem:[%s5 + $0xb30] sm:$0xff]
  %v1547 = vld [vmem:[%s5 + $0xb38] sm:$0xff]
  %v1548 = vld [vmem:[%s5 + $0xb40] sm:$0xff]
  %v1549 = vld [vmem:[%s5 + $0xb48] sm:$0xff]
  %v1550 = vld [vmem:[%s5 + $0xb50] sm:$0xff]
  %v1551 = vld [vmem:[%s5 + $0xb58] sm:$0xff]
  %v1552 = vld [vmem:[%s5 + $0xb60] sm:$0xff]
  %v1553 = vld [vmem:[%s5 + $0xb68] sm:$0xff]
  %v1554 = vld [vmem:[%s5 + $0xb70] sm:$0xff]
  %v1555 = vld [vmem:[%s5 + $0xb78] sm:$0xff]
  %v1556 = vld [vmem:[%s5 + $0xb80] sm:$0xff]
  %v1557 = vld [vmem:[%s5 + $0xb88] sm:$0xff]
  %v1558 = vld [vmem:[%s5 + $0xb90] sm:$0xff]
  %v1559 = vld [vmem:[%s5 + $0xb98] sm:$0xff]
  %v1560 = vld [vmem:[%s5 + $0xba0] sm:$0xff]
  %v1561 = vld [vmem:[%s5 + $0xba8] sm:$0xff]
  %v1562 = vld [vmem:[%s5 + $0xbb0] sm:$0xff]
  %v1563 = vld [vmem:[%s5 + $0xbb8] sm:$0xff]
  %v1564 = vld [vmem:[%s5 + $0xbc0] sm:$0xff]
  %v1565 = vld [vmem:[%s5 + $0xbc8] sm:$0xff]
  %v1566 = vld [vmem:[%s5 + $0xbd0] sm:$0xff]
  %v1567 = vld [vmem:[%s5 + $0xbd8] sm:$0xff]
  %v1568 = vld [vmem:[%s5 + $0xbe0] sm:$0xff]
  %v1569 = vld [vmem:[%s5 + $0xbe8] sm:$0xff]
  %v1570 = vld [vmem:[%s5 + $0xbf0] sm:$0xff]
  %v1571 = vld [vmem:[%s5 + $0xbf8] sm:$0xff]
  %v1572 = vld [vmem:[%s5 + $0xc00] sm:$0xff]
  %v1573 = vld [vmem:[%s5 + $0xc08] sm:$0xff]
  %v1574 = vld [vmem:[%s5 + $0xc10] sm:$0xff]
  %v1575 = vld [vmem:[%s5 + $0xc18] sm:$0xff]
  %v1576 = vld [vmem:[%s5 + $0xc20] sm:$0xff]
  %v1577 = vld [vmem:[%s5 + $0xc28] sm:$0xff]
  %v1578 = vld [vmem:[%s5 + $0xc30] sm:$0xff]
  %v1579 = vld [vmem:[%s5 + $0xc38] sm:$0xff]
  %v1580 = vld [vmem:[%s5 + $0xc40] sm:$0xff]
  %v1581 = vld [vmem:[%s5 + $0xc48] sm:$0xff]
  %v1582 = vld [vmem:[%s5 + $0xc50] sm:$0xff]
  %v1583 = vld [vmem:[%s5 + $0xc58] sm:$0xff]
  %v1584 = vld [vmem:[%s5 + $0xc60] sm:$0xff]
  %v1585 = vld [vmem:[%s5 + $0xc68] sm:$0xff]
  %v1586 = vld [vmem:[%s5 + $0xc70] sm:$0xff]
  %v1587 = vld [vmem:[%s5 + $0xc78] sm:$0xff]
  %v1588 = vld [vmem:[%s5 + $0xc80] sm:$0xff]
  %v1589 = vld [vmem:[%s5 + $0xc88] sm:$0xff]
  %v1590 = vld [vmem:[%s5 + $0xc90] sm:$0xff]
  %v1591 = vld [vmem:[%s5 + $0xc98] sm:$0xff]
  %v1592 = vld [vmem:[%s5 + $0xca0] sm:$0xff]
  %v1593 = vld [vmem:[%s5 + $0xca8] sm:$0xff]
  %v1594 = vld [vmem:[%s5 + $0xcb0] sm:$0xff]
  %v1595 = vld [vmem:[%s5 + $0xcb8] sm:$0xff]
  %v1596 = vld [vmem:[%s5 + $0xcc0] sm:$0xff]
  %v1597 = vld [vmem:[%s5 + $0xcc8] sm:$0xff]
  %v1598 = vld [vmem:[%s5 + $0xcd0] sm:$0xff]
  %v1599 = vld [vmem:[%s5 + $0xcd8] sm:$0xff]
  %v1600 = vld [vmem:[%s5 + $0xce0] sm:$0xff]
  %v1601 = vld [vmem:[%s5 + $0xce8] sm:$0xff]
  %v1602 = vld [vmem:[%s5 + $0xcf0] sm:$0xff]
  %v1603 = vld [vmem:[%s5 + $0xcf8] sm:$0xff]
  %v1604 = vld [vmem:[%s5 + $0xd00] sm:$0xff]
  %v1605 = vld [vmem:[%s5 + $0xd08] sm:$0xff]
  %v1606 = vld [vmem:[%s5 + $0xd10] sm:$0xff]
  %v1607 = vld [vmem:[%s5 + $0xd18] sm:$0xff]
  %v1608 = vld [vmem:[%s5 + $0xd20] sm:$0xff]
  %v1609 = vld [vmem:[%s5 + $0xd28] sm:$0xff]
  %v1610 = vld [vmem:[%s5 + $0xd30] sm:$0xff]
  %v1611 = vld [vmem:[%s5 + $0xd38] sm:$0xff]
  %v1612 = vld [vmem:[%s5 + $0xd40] sm:$0xff]
  %v1613 = vld [vmem:[%s5 + $0xd48] sm:$0xff]
  %v1614 = vld [vmem:[%s5 + $0xd50] sm:$0xff]
  %v1615 = vld [vmem:[%s5 + $0xd58] sm:$0xff]
  %v1616 = vld [vmem:[%s5 + $0xd60] sm:$0xff]
  %v1617 = vld [vmem:[%s5 + $0xd68] sm:$0xff]
  %v1618 = vld [vmem:[%s5 + $0xd70] sm:$0xff]
  %v1619 = vld [vmem:[%s5 + $0xd78] sm:$0xff]
  %v1620 = vld [vmem:[%s5 + $0xd80] sm:$0xff]
  %v1621 = vld [vmem:[%s5 + $0xd88] sm:$0xff]
  %v1622 = vld [vmem:[%s5 + $0xd90] sm:$0xff]
  %v1623 = vld [vmem:[%s5 + $0xd98] sm:$0xff]
  %v1624 = vld [vmem:[%s5 + $0xda0] sm:$0xff]
  %v1625 = vld [vmem:[%s5 + $0xda8] sm:$0xff]
  %v1626 = vld [vmem:[%s5 + $0xdb0] sm:$0xff]
  %v1627 = vld [vmem:[%s5 + $0xdb8] sm:$0xff]
  %v1628 = vld [vmem:[%s5 + $0xdc0] sm:$0xff]
  %v1629 = vld [vmem:[%s5 + $0xdc8] sm:$0xff]
  %v1630 = vld [vmem:[%s5 + $0xdd0] sm:$0xff]
  %v1631 = vld [vmem:[%s5 + $0xdd8] sm:$0xff]
  %v1632 = vld [vmem:[%s5 + $0xde0] sm:$0xff]
  %v1633 = vld [vmem:[%s5 + $0xde8] sm:$0xff]
  %v1634 = vld [vmem:[%s5 + $0xdf0] sm:$0xff]
  %v1635 = vld [vmem:[%s5 + $0xdf8] sm:$0xff]
  %v1636 = vld [vmem:[%s5 + $0xe00] sm:$0xff]
  %v1637 = vld [vmem:[%s5 + $0xe08] sm:$0xff]
  %v1638 = vld [vmem:[%s5 + $0xe10] sm:$0xff]
  %v1639 = vld [vmem:[%s5 + $0xe18] sm:$0xff]
  %v1640 = vld [vmem:[%s5 + $0xe20] sm:$0xff]
  %v1641 = vld [vmem:[%s5 + $0xe28] sm:$0xff]
  %v1642 = vld [vmem:[%s5 + $0xe30] sm:$0xff]
  %v1643 = vld [vmem:[%s5 + $0xe38] sm:$0xff]
  %v1644 = vld [vmem:[%s5 + $0xe40] sm:$0xff]
  %v1645 = vld [vmem:[%s5 + $0xe48] sm:$0xff]
  %v1646 = vld [vmem:[%s5 + $0xe50] sm:$0xff]
  %v1647 = vld [vmem:[%s5 + $0xe58] sm:$0xff]
  %v1648 = vld [vmem:[%s5 + $0xe60] sm:$0xff]
  %v1649 = vld [vmem:[%s5 + $0xe68] sm:$0xff]
  %v1650 = vld [vmem:[%s5 + $0xe70] sm:$0xff]
  %v1651 = vld [vmem:[%s5 + $0xe78] sm:$0xff]
  %v1652 = vld [vmem:[%s5 + $0xe80] sm:$0xff]
  %v1653 = vld [vmem:[%s5 + $0xe88] sm:$0xff]
  %v1654 = vld [vmem:[%s5 + $0xe90] sm:$0xff]
  %v1655 = vld [vmem:[%s5 + $0xe98] sm:$0xff]
  %v1656 = vld [vmem:[%s5 + $0xea0] sm:$0xff]
  %v1657 = vld [vmem:[%s5 + $0xea8] sm:$0xff]
  %v1658 = vld [vmem:[%s5 + $0xeb0] sm:$0xff]
  %v1659 = vld [vmem:[%s5 + $0xeb8] sm:$0xff]
  %v1660 = vld [vmem:[%s5 + $0xec0] sm:$0xff]
  %v1661 = vld [vmem:[%s5 + $0xec8] sm:$0xff]
  %v1662 = vld [vmem:[%s5 + $0xed0] sm:$0xff]
  %v1663 = vld [vmem:[%s5 + $0xed8] sm:$0xff]
  %v1664 = vld [vmem:[%s5 + $0xee0] sm:$0xff]
  %v1665 = vld [vmem:[%s5 + $0xee8] sm:$0xff]
  %v1666 = vld [vmem:[%s5 + $0xef0] sm:$0xff]
  %v1667 = vld [vmem:[%s5 + $0xef8] sm:$0xff]
  %v1668 = vld [vmem:[%s6] sm:$0x1f]
  %v1670 = vperm.slane %v1668, 0
  %v1671 = vperm.slane %v1668, 1
  %v1672 = vperm.slane %v1668, 2
  %v1673 = vperm.slane %v1668, 3
  %v1674 = vperm.slane %v1668, 4
  %1680 = vmatpush.msra.mxu0 %v1263
  %1681 = vmatpush.msra.mxu0 %v1258
  %1682 = vmatpush.msra.mxu0 %v1253
  %1683 = vmatpush.msra.mxu0 %v1248
  %1684 = vmatpush.msra.mxu0 %v1243
  %1685 = vmatpush.msra.mxu0 %v1238
  %1686 = vmatpush.msra.mxu0 %v1233
  %1687 = vmatpush.msra.mxu0 %v1228
  %1688 = vmatpush.msra.mxu0 %v1223
  %1689 = vmatpush.msra.mxu0 %v1218
  %1690 = vmatpush.msra.mxu0 %v1213
  %1691 = vmatpush.msra.mxu0 %v1208
  %1692 = vmatpush.msra.mxu0 %v1203
  %1693 = vmatpush.msra.mxu0 %v1198
  %1694 = vmatpush.msra.mxu0 %v1193
  %1695 = vmatpush.msra.mxu0 %v1188
  %1696 = vmatmul.f32.gmra.mxu0 %v1182
  %v1697 = vpop.f32.mrf.mxu0
  %v1698 = vadd.f32 %v1670, %v1697
  %1699 = vdwg.mxu0
  %1700 = vmatpush.msra.mxu0 %v1343
  %1701 = vmatpush.msra.mxu0 %v1338
  %1702 = vmatpush.msra.mxu0 %v1333
  %1703 = vmatpush.msra.mxu0 %v1328
  %1704 = vmatpush.msra.mxu0 %v1323
  %1705 = vmatpush.msra.mxu0 %v1318
  %1706 = vmatpush.msra.mxu0 %v1313
  %1707 = vmatpush.msra.mxu0 %v1308
  %1708 = vmatpush.msra.mxu0 %v1303
  %1709 = vmatpush.msra.mxu0 %v1298
  %1710 = vmatpush.msra.mxu0 %v1293
  %1711 = vmatpush.msra.mxu0 %v1288
  %1712 = vmatpush.msra.mxu0 %v1283
  %1713 = vmatpush.msra.mxu0 %v1278
  %1714 = vmatpush.msra.mxu0 %v1273
  %1715 = vmatpush.msra.mxu0 %v1268
  %1716 = vmatmul.f32.gmra.mxu0 %v1183
  %v1717 = vpop.f32.mrf.mxu0
  %v1718 = vadd.f32 %v1698, %v1717
  %1719 = vdwg.mxu0
  %1720 = vmatpush.msra.mxu0 %v1423
  %1721 = vmatpush.msra.mxu0 %v1418
  %1722 = vmatpush.msra.mxu0 %v1413
  %1723 = vmatpush.msra.mxu0 %v1408
  %1724 = vmatpush.msra.mxu0 %v1403
  %1725 = vmatpush.msra.mxu0 %v1398
  %1726 = vmatpush.msra.mxu0 %v1393
  %1727 = vmatpush.msra.mxu0 %v1388
  %1728 = vmatpush.msra.mxu0 %v1383
  %1729 = vmatpush.msra.mxu0 %v1378
  %1730 = vmatpush.msra.mxu0 %v1373
  %1731 = vmatpush.msra.mxu0 %v1368
  %1732 = vmatpush.msra.mxu0 %v1363
  %1733 = vmatpush.msra.mxu0 %v1358
  %1734 = vmatpush.msra.mxu0 %v1353
  %1735 = vmatpush.msra.mxu0 %v1348
  %1736 = vmatmul.f32.gmra.mxu0 %v1184
  %v1737 = vpop.f32.mrf.mxu0
  %v1738 = vadd.f32 %v1718, %v1737
  %1739 = vdwg.mxu0
  %1740 = vmatpush.msra.mxu0 %v1503
  %1741 = vmatpush.msra.mxu0 %v1498
  %1742 = vmatpush.msra.mxu0 %v1493
  %1743 = vmatpush.msra.mxu0 %v1488
  %1744 = vmatpush.msra.mxu0 %v1483
  %1745 = vmatpush.msra.mxu0 %v1478
  %1746 = vmatpush.msra.mxu0 %v1473
  %1747 = vmatpush.msra.mxu0 %v1468
  %1748 = vmatpush.msra.mxu0 %v1463
  %1749 = vmatpush.msra.mxu0 %v1458
  %1750 = vmatpush.msra.mxu0 %v1453
  %1751 = vmatpush.msra.mxu0 %v1448
  %1752 = vmatpush.msra.mxu0 %v1443
  %1753 = vmatpush.msra.mxu0 %v1438
  %1754 = vmatpush.msra.mxu0 %v1433
  %1755 = vmatpush.msra.mxu0 %v1428
  %1756 = vmatmul.f32.gmra.mxu0 %v1185
  %v1757 = vpop.f32.mrf.mxu0
  %v1758 = vadd.f32 %v1738, %v1757
  %1759 = vdwg.mxu0
  %1760 = vmatpush.msra.mxu0 %v1583
  %1761 = vmatpush.msra.mxu0 %v1578
  %1762 = vmatpush.msra.mxu0 %v1573
  %1763 = vmatpush.msra.mxu0 %v1568
  %1764 = vmatpush.msra.mxu0 %v1563
  %1765 = vmatpush.msra.mxu0 %v1558
  %1766 = vmatpush.msra.mxu0 %v1553
  %1767 = vmatpush.msra.mxu0 %v1548
  %1768 = vmatpush.msra.mxu0 %v1543
  %1769 = vmatpush.msra.mxu0 %v1538
  %1770 = vmatpush.msra.mxu0 %v1533
  %1771 = vmatpush.msra.mxu0 %v1528
  %1772 = vmatpush.msra.mxu0 %v1523
  %1773 = vmatpush.msra.mxu0 %v1518
  %1774 = vmatpush.msra.mxu0 %v1513
  %1775 = vmatpush.msra.mxu0 %v1508
  %1776 = vmatmul.f32.gmra.mxu0 %v1186
  %v1777 = vpop.f32.mrf.mxu0
  %v1778 = vadd.f32 %v1758, %v1777
  %1779 = vdwg.mxu0
  %1780 = vmatpush.msra.mxu0 %v1663
  %1781 = vmatpush.msra.mxu0 %v1658
  %1782 = vmatpush.msra.mxu0 %v1653
  %1783 = vmatpush.msra.mxu0 %v1648
  %1784 = vmatpush.msra.mxu0 %v1643
  %1785 = vmatpush.msra.mxu0 %v1638
  %1786 = vmatpush.msra.mxu0 %v1633
  %1787 = vmatpush.msra.mxu0 %v1628
  %1788 = vmatpush.msra.mxu0 %v1623
  %1789 = vmatpush.msra.mxu0 %v1618
  %1790 = vmatpush.msra.mxu0 %v1613
  %1791 = vmatpush.msra.mxu0 %v1608
  %1792 = vmatpush.msra.mxu0 %v1603
  %1793 = vmatpush.msra.mxu0 %v1598
  %1794 = vmatpush.msra.mxu0 %v1593
  %1795 = vmatpush.msra.mxu0 %v1588
  %1796 = vmatmul.f32.gmra.mxu0 %v1187
  %v1797 = vpop.f32.mrf.mxu0
  %v1798 = vadd.f32 %v1778, %v1797
  %1799 = vdwg.mxu0
  %1800 = vmatpush.msra.mxu0 %v1264
  %1801 = vmatpush.msra.mxu0 %v1259
  %1802 = vmatpush.msra.mxu0 %v1254
  %1803 = vmatpush.msra.mxu0 %v1249
  %1804 = vmatpush.msra.mxu0 %v1244
  %1805 = vmatpush.msra.mxu0 %v1239
  %1806 = vmatpush.msra.mxu0 %v1234
  %1807 = vmatpush.msra.mxu0 %v1229
  %1808 = vmatpush.msra.mxu0 %v1224
  %1809 = vmatpush.msra.mxu0 %v1219
  %1810 = vmatpush.msra.mxu0 %v1214
  %1811 = vmatpush.msra.mxu0 %v1209
  %1812 = vmatpush.msra.mxu0 %v1204
  %1813 = vmatpush.msra.mxu0 %v1199
  %1814 = vmatpush.msra.mxu0 %v1194
  %1815 = vmatpush.msra.mxu0 %v1189
  %1816 = vmatmul.f32.gmra.mxu0 %v1182
  %v1817 = vpop.f32.mrf.mxu0
  %v1818 = vadd.f32 %v1671, %v1817
  %1819 = vdwg.mxu0
  %1820 = vmatpush.msra.mxu0 %v1344
  %1821 = vmatpush.msra.mxu0 %v1339
  %1822 = vmatpush.msra.mxu0 %v1334
  %1823 = vmatpush.msra.mxu0 %v1329
  %1824 = vmatpush.msra.mxu0 %v1324
  %1825 = vmatpush.msra.mxu0 %v1319
  %1826 = vmatpush.msra.mxu0 %v1314
  %1827 = vmatpush.msra.mxu0 %v1309
  %1828 = vmatpush.msra.mxu0 %v1304
  %1829 = vmatpush.msra.mxu0 %v1299
  %1830 = vmatpush.msra.mxu0 %v1294
  %1831 = vmatpush.msra.mxu0 %v1289
  %1832 = vmatpush.msra.mxu0 %v1284
  %1833 = vmatpush.msra.mxu0 %v1279
  %1834 = vmatpush.msra.mxu0 %v1274
  %1835 = vmatpush.msra.mxu0 %v1269
  %1836 = vmatmul.f32.gmra.mxu0 %v1183
  %v1837 = vpop.f32.mrf.mxu0
  %v1838 = vadd.f32 %v1818, %v1837
  %1839 = vdwg.mxu0
  %1840 = vmatpush.msra.mxu0 %v1424
  %1841 = vmatpush.msra.mxu0 %v1419
  %1842 = vmatpush.msra.mxu0 %v1414
  %1843 = vmatpush.msra.mxu0 %v1409
  %1844 = vmatpush.msra.mxu0 %v1404
  %1845 = vmatpush.msra.mxu0 %v1399
  %1846 = vmatpush.msra.mxu0 %v1394
  %1847 = vmatpush.msra.mxu0 %v1389
  %1848 = vmatpush.msra.mxu0 %v1384
  %1849 = vmatpush.msra.mxu0 %v1379
  %1850 = vmatpush.msra.mxu0 %v1374
  %1851 = vmatpush.msra.mxu0 %v1369
  %1852 = vmatpush.msra.mxu0 %v1364
  %1853 = vmatpush.msra.mxu0 %v1359
  %1854 = vmatpush.msra.mxu0 %v1354
  %1855 = vmatpush.msra.mxu0 %v1349
  %1856 = vmatmul.f32.gmra.mxu0 %v1184
  %v1857 = vpop.f32.mrf.mxu0
  %v1858 = vadd.f32 %v1838, %v1857
  %1859 = vdwg.mxu0
  %1860 = vmatpush.msra.mxu0 %v1504
  %1861 = vmatpush.msra.mxu0 %v1499
  %1862 = vmatpush.msra.mxu0 %v1494
  %1863 = vmatpush.msra.mxu0 %v1489
  %1864 = vmatpush.msra.mxu0 %v1484
  %1865 = vmatpush.msra.mxu0 %v1479
  %1866 = vmatpush.msra.mxu0 %v1474
  %1867 = vmatpush.msra.mxu0 %v1469
  %1868 = vmatpush.msra.mxu0 %v1464
  %1869 = vmatpush.msra.mxu0 %v1459
  %1870 = vmatpush.msra.mxu0 %v1454
  %1871 = vmatpush.msra.mxu0 %v1449
  %1872 = vmatpush.msra.mxu0 %v1444
  %1873 = vmatpush.msra.mxu0 %v1439
  %1874 = vmatpush.msra.mxu0 %v1434
  %1875 = vmatpush.msra.mxu0 %v1429
  %1876 = vmatmul.f32.gmra.mxu0 %v1185
  %v1877 = vpop.f32.mrf.mxu0
  %v1878 = vadd.f32 %v1858, %v1877
  %1879 = vdwg.mxu0
  %1880 = vmatpush.msra.mxu0 %v1584
  %1881 = vmatpush.msra.mxu0 %v1579
  %1882 = vmatpush.msra.mxu0 %v1574
  %1883 = vmatpush.msra.mxu0 %v1569
  %1884 = vmatpush.msra.mxu0 %v1564
  %1885 = vmatpush.msra.mxu0 %v1559
  %1886 = vmatpush.msra.mxu0 %v1554
  %1887 = vmatpush.msra.mxu0 %v1549
  %1888 = vmatpush.msra.mxu0 %v1544
  %1889 = vmatpush.msra.mxu0 %v1539
  %1890 = vmatpush.msra.mxu0 %v1534
  %1891 = vmatpush.msra.mxu0 %v1529
  %1892 = vmatpush.msra.mxu0 %v1524
  %1893 = vmatpush.msra.mxu0 %v1519
  %1894 = vmatpush.msra.mxu0 %v1514
  %1895 = vmatpush.msra.mxu0 %v1509
  %1896 = vmatmul.f32.gmra.mxu0 %v1186
  %v1897 = vpop.f32.mrf.mxu0
  %v1898 = vadd.f32 %v1878, %v1897
  %1899 = vdwg.mxu0
  %1900 = vmatpush.msra.mxu0 %v1664
  %1901 = vmatpush.msra.mxu0 %v1659
  %1902 = vmatpush.msra.mxu0 %v1654
  %1903 = vmatpush.msra.mxu0 %v1649
  %1904 = vmatpush.msra.mxu0 %v1644
  %1905 = vmatpush.msra.mxu0 %v1639
  %1906 = vmatpush.msra.mxu0 %v1634
  %1907 = vmatpush.msra.mxu0 %v1629
  %1908 = vmatpush.msra.mxu0 %v1624
  %1909 = vmatpush.msra.mxu0 %v1619
  %1910 = vmatpush.msra.mxu0 %v1614
  %1911 = vmatpush.msra.mxu0 %v1609
  %1912 = vmatpush.msra.mxu0 %v1604
  %1913 = vmatpush.msra.mxu0 %v1599
  %1914 = vmatpush.msra.mxu0 %v1594
  %1915 = vmatpush.msra.mxu0 %v1589
  %1916 = vmatmul.f32.gmra.mxu0 %v1187
  %v1917 = vpop.f32.mrf.mxu0
  %v1918 = vadd.f32 %v1898, %v1917
  %1919 = vdwg.mxu0
  %1920 = vmatpush.msra.mxu0 %v1265
  %1921 = vmatpush.msra.mxu0 %v1260
  %1922 = vmatpush.msra.mxu0 %v1255
  %1923 = vmatpush.msra.mxu0 %v1250
  %1924 = vmatpush.msra.mxu0 %v1245
  %1925 = vmatpush.msra.mxu0 %v1240
  %1926 = vmatpush.msra.mxu0 %v1235
  %1927 = vmatpush.msra.mxu0 %v1230
  %1928 = vmatpush.msra.mxu0 %v1225
  %1929 = vmatpush.msra.mxu0 %v1220
  %1930 = vmatpush.msra.mxu0 %v1215
  %1931 = vmatpush.msra.mxu0 %v1210
  %1932 = vmatpush.msra.mxu0 %v1205
  %1933 = vmatpush.msra.mxu0 %v1200
  %1934 = vmatpush.msra.mxu0 %v1195
  %1935 = vmatpush.msra.mxu0 %v1190
  %1936 = vmatmul.f32.gmra.mxu0 %v1182
  %v1937 = vpop.f32.mrf.mxu0
  %v1938 = vadd.f32 %v1672, %v1937
  %1939 = vdwg.mxu0
  %1940 = vmatpush.msra.mxu0 %v1345
  %1941 = vmatpush.msra.mxu0 %v1340
  %1942 = vmatpush.msra.mxu0 %v1335
  %1943 = vmatpush.msra.mxu0 %v1330
  %1944 = vmatpush.msra.mxu0 %v1325
  %1945 = vmatpush.msra.mxu0 %v1320
  %1946 = vmatpush.msra.mxu0 %v1315
  %1947 = vmatpush.msra.mxu0 %v1310
  %1948 = vmatpush.msra.mxu0 %v1305
  %1949 = vmatpush.msra.mxu0 %v1300
  %1950 = vmatpush.msra.mxu0 %v1295
  %1951 = vmatpush.msra.mxu0 %v1290
  %1952 = vmatpush.msra.mxu0 %v1285
  %1953 = vmatpush.msra.mxu0 %v1280
  %1954 = vmatpush.msra.mxu0 %v1275
  %1955 = vmatpush.msra.mxu0 %v1270
  %1956 = vmatmul.f32.gmra.mxu0 %v1183
  %v1957 = vpop.f32.mrf.mxu0
  %v1958 = vadd.f32 %v1938, %v1957
  %1959 = vdwg.mxu0
  %1960 = vmatpush.msra.mxu0 %v1425
  %1961 = vmatpush.msra.mxu0 %v1420
  %1962 = vmatpush.msra.mxu0 %v1415
  %1963 = vmatpush.msra.mxu0 %v1410
  %1964 = vmatpush.msra.mxu0 %v1405
  %1965 = vmatpush.msra.mxu0 %v1400
  %1966 = vmatpush.msra.mxu0 %v1395
  %1967 = vmatpush.msra.mxu0 %v1390
  %1968 = vmatpush.msra.mxu0 %v1385
  %1969 = vmatpush.msra.mxu0 %v1380
  %1970 = vmatpush.msra.mxu0 %v1375
  %1971 = vmatpush.msra.mxu0 %v1370
  %1972 = vmatpush.msra.mxu0 %v1365
  %1973 = vmatpush.msra.mxu0 %v1360
  %1974 = vmatpush.msra.mxu0 %v1355
  %1975 = vmatpush.msra.mxu0 %v1350
  %1976 = vmatmul.f32.gmra.mxu0 %v1184
  %v1977 = vpop.f32.mrf.mxu0
  %v1978 = vadd.f32 %v1958, %v1977
  %1979 = vdwg.mxu0
  %1980 = vmatpush.msra.mxu0 %v1505
  %1981 = vmatpush.msra.mxu0 %v1500
  %1982 = vmatpush.msra.mxu0 %v1495
  %1983 = vmatpush.msra.mxu0 %v1490
  %1984 = vmatpush.msra.mxu0 %v1485
  %1985 = vmatpush.msra.mxu0 %v1480
  %1986 = vmatpush.msra.mxu0 %v1475
  %1987 = vmatpush.msra.mxu0 %v1470
  %1988 = vmatpush.msra.mxu0 %v1465
  %1989 = vmatpush.msra.mxu0 %v1460
  %1990 = vmatpush.msra.mxu0 %v1455
  %1991 = vmatpush.msra.mxu0 %v1450
  %1992 = vmatpush.msra.mxu0 %v1445
  %1993 = vmatpush.msra.mxu0 %v1440
  %1994 = vmatpush.msra.mxu0 %v1435
  %1995 = vmatpush.msra.mxu0 %v1430
  %1996 = vmatmul.f32.gmra.mxu0 %v1185
  %v1997 = vpop.f32.mrf.mxu0
  %v1998 = vadd.f32 %v1978, %v1997
  %1999 = vdwg.mxu0
  %2000 = vmatpush.msra.mxu0 %v1585
  %2001 = vmatpush.msra.mxu0 %v1580
  %2002 = vmatpush.msra.mxu0 %v1575
  %2003 = vmatpush.msra.mxu0 %v1570
  %2004 = vmatpush.msra.mxu0 %v1565
  %2005 = vmatpush.msra.mxu0 %v1560
  %2006 = vmatpush.msra.mxu0 %v1555
  %2007 = vmatpush.msra.mxu0 %v1550
  %2008 = vmatpush.msra.mxu0 %v1545
  %2009 = vmatpush.msra.mxu0 %v1540
  %2010 = vmatpush.msra.mxu0 %v1535
  %2011 = vmatpush.msra.mxu0 %v1530
  %2012 = vmatpush.msra.mxu0 %v1525
  %2013 = vmatpush.msra.mxu0 %v1520
  %2014 = vmatpush.msra.mxu0 %v1515
  %2015 = vmatpush.msra.mxu0 %v1510
  %2016 = vmatmul.f32.gmra.mxu0 %v1186
  %v2017 = vpop.f32.mrf.mxu0
  %v2018 = vadd.f32 %v1998, %v2017
  %2019 = vdwg.mxu0
  %2020 = vmatpush.msra.mxu0 %v1665
  %2021 = vmatpush.msra.mxu0 %v1660
  %2022 = vmatpush.msra.mxu0 %v1655
  %2023 = vmatpush.msra.mxu0 %v1650
  %2024 = vmatpush.msra.mxu0 %v1645
  %2025 = vmatpush.msra.mxu0 %v1640
  %2026 = vmatpush.msra.mxu0 %v1635
  %2027 = vmatpush.msra.mxu0 %v1630
  %2028 = vmatpush.msra.mxu0 %v1625
  %2029 = vmatpush.msra.mxu0 %v1620
  %2030 = vmatpush.msra.mxu0 %v1615
  %2031 = vmatpush.msra.mxu0 %v1610
  %2032 = vmatpush.msra.mxu0 %v1605
  %2033 = vmatpush.msra.mxu0 %v1600
  %2034 = vmatpush.msra.mxu0 %v1595
  %2035 = vmatpush.msra.mxu0 %v1590
  %2036 = vmatmul.f32.gmra.mxu0 %v1187
  %v2037 = vpop.f32.mrf.mxu0
  %v2038 = vadd.f32 %v2018, %v2037
  %2039 = vdwg.mxu0
  %2040 = vmatpush.msra.mxu0 %v1266
  %2041 = vmatpush.msra.mxu0 %v1261
  %2042 = vmatpush.msra.mxu0 %v1256
  %2043 = vmatpush.msra.mxu0 %v1251
  %2044 = vmatpush.msra.mxu0 %v1246
  %2045 = vmatpush.msra.mxu0 %v1241
  %2046 = vmatpush.msra.mxu0 %v1236
  %2047 = vmatpush.msra.mxu0 %v1231
  %2048 = vmatpush.msra.mxu0 %v1226
  %2049 = vmatpush.msra.mxu0 %v1221
  %2050 = vmatpush.msra.mxu0 %v1216
  %2051 = vmatpush.msra.mxu0 %v1211
  %2052 = vmatpush.msra.mxu0 %v1206
  %2053 = vmatpush.msra.mxu0 %v1201
  %2054 = vmatpush.msra.mxu0 %v1196
  %2055 = vmatpush.msra.mxu0 %v1191
  %2056 = vmatmul.f32.gmra.mxu0 %v1182
  %v2057 = vpop.f32.mrf.mxu0
  %v2058 = vadd.f32 %v1673, %v2057
  %2059 = vdwg.mxu0
  %2060 = vmatpush.msra.mxu0 %v1346
  %2061 = vmatpush.msra.mxu0 %v1341
  %2062 = vmatpush.msra.mxu0 %v1336
  %2063 = vmatpush.msra.mxu0 %v1331
  %2064 = vmatpush.msra.mxu0 %v1326
  %2065 = vmatpush.msra.mxu0 %v1321
  %2066 = vmatpush.msra.mxu0 %v1316
  %2067 = vmatpush.msra.mxu0 %v1311
  %2068 = vmatpush.msra.mxu0 %v1306
  %2069 = vmatpush.msra.mxu0 %v1301
  %2070 = vmatpush.msra.mxu0 %v1296
  %2071 = vmatpush.msra.mxu0 %v1291
  %2072 = vmatpush.msra.mxu0 %v1286
  %2073 = vmatpush.msra.mxu0 %v1281
  %2074 = vmatpush.msra.mxu0 %v1276
  %2075 = vmatpush.msra.mxu0 %v1271
  %2076 = vmatmul.f32.gmra.mxu0 %v1183
  %v2077 = vpop.f32.mrf.mxu0
  %v2078 = vadd.f32 %v2058, %v2077
  %2079 = vdwg.mxu0
  %2080 = vmatpush.msra.mxu0 %v1426
  %2081 = vmatpush.msra.mxu0 %v1421
  %2082 = vmatpush.msra.mxu0 %v1416
  %2083 = vmatpush.msra.mxu0 %v1411
  %2084 = vmatpush.msra.mxu0 %v1406
  %2085 = vmatpush.msra.mxu0 %v1401
  %2086 = vmatpush.msra.mxu0 %v1396
  %2087 = vmatpush.msra.mxu0 %v1391
  %2088 = vmatpush.msra.mxu0 %v1386
  %2089 = vmatpush.msra.mxu0 %v1381
  %2090 = vmatpush.msra.mxu0 %v1376
  %2091 = vmatpush.msra.mxu0 %v1371
  %2092 = vmatpush.msra.mxu0 %v1366
  %2093 = vmatpush.msra.mxu0 %v1361
  %2094 = vmatpush.msra.mxu0 %v1356
  %2095 = vmatpush.msra.mxu0 %v1351
  %2096 = vmatmul.f32.gmra.mxu0 %v1184
  %v2097 = vpop.f32.mrf.mxu0
  %v2098 = vadd.f32 %v2078, %v2097
  %2099 = vdwg.mxu0
  %2100 = vmatpush.msra.mxu0 %v1506
  %2101 = vmatpush.msra.mxu0 %v1501
  %2102 = vmatpush.msra.mxu0 %v1496
  %2103 = vmatpush.msra.mxu0 %v1491
  %2104 = vmatpush.msra.mxu0 %v1486
  %2105 = vmatpush.msra.mxu0 %v1481
  %2106 = vmatpush.msra.mxu0 %v1476
  %2107 = vmatpush.msra.mxu0 %v1471
  %2108 = vmatpush.msra.mxu0 %v1466
  %2109 = vmatpush.msra.mxu0 %v1461
  %2110 = vmatpush.msra.mxu0 %v1456
  %2111 = vmatpush.msra.mxu0 %v1451
  %2112 = vmatpush.msra.mxu0 %v1446
  %2113 = vmatpush.msra.mxu0 %v1441
  %2114 = vmatpush.msra.mxu0 %v1436
  %2115 = vmatpush.msra.mxu0 %v1431
  %2116 = vmatmul.f32.gmra.mxu0 %v1185
  %v2117 = vpop.f32.mrf.mxu0
  %v2118 = vadd.f32 %v2098, %v2117
  %2119 = vdwg.mxu0
  %2120 = vmatpush.msra.mxu0 %v1586
  %2121 = vmatpush.msra.mxu0 %v1581
  %2122 = vmatpush.msra.mxu0 %v1576
  %2123 = vmatpush.msra.mxu0 %v1571
  %2124 = vmatpush.msra.mxu0 %v1566
  %2125 = vmatpush.msra.mxu0 %v1561
  %2126 = vmatpush.msra.mxu0 %v1556
  %2127 = vmatpush.msra.mxu0 %v1551
  %2128 = vmatpush.msra.mxu0 %v1546
  %2129 = vmatpush.msra.mxu0 %v1541
  %2130 = vmatpush.msra.mxu0 %v1536
  %2131 = vmatpush.msra.mxu0 %v1531
  %2132 = vmatpush.msra.mxu0 %v1526
  %2133 = vmatpush.msra.mxu0 %v1521
  %2134 = vmatpush.msra.mxu0 %v1516
  %2135 = vmatpush.msra.mxu0 %v1511
  %2136 = vmatmul.f32.gmra.mxu0 %v1186
  %v2137 = vpop.f32.mrf.mxu0
  %v2138 = vadd.f32 %v2118, %v2137
  %2139 = vdwg.mxu0
  %2140 = vmatpush.msra.mxu0 %v1666
  %2141 = vmatpush.msra.mxu0 %v1661
  %2142 = vmatpush.msra.mxu0 %v1656
  %2143 = vmatpush.msra.mxu0 %v1651
  %2144 = vmatpush.msra.mxu0 %v1646
  %2145 = vmatpush.msra.mxu0 %v1641
  %2146 = vmatpush.msra.mxu0 %v1636
  %2147 = vmatpush.msra.mxu0 %v1631
  %2148 = vmatpush.msra.mxu0 %v1626
  %2149 = vmatpush.msra.mxu0 %v1621
  %2150 = vmatpush.msra.mxu0 %v1616
  %2151 = vmatpush.msra.mxu0 %v1611
  %2152 = vmatpush.msra.mxu0 %v1606
  %2153 = vmatpush.msra.mxu0 %v1601
  %2154 = vmatpush.msra.mxu0 %v1596
  %2155 = vmatpush.msra.mxu0 %v1591
  %2156 = vmatmul.f32.gmra.mxu0 %v1187
  %v2157 = vpop.f32.mrf.mxu0
  %v2158 = vadd.f32 %v2138, %v2157
  %2159 = vdwg.mxu0
  %2160 = vmatpush.msra.mxu0 %v1267
  %2161 = vmatpush.msra.mxu0 %v1262
  %2162 = vmatpush.msra.mxu0 %v1257
  %2163 = vmatpush.msra.mxu0 %v1252
  %2164 = vmatpush.msra.mxu0 %v1247
  %2165 = vmatpush.msra.mxu0 %v1242
  %2166 = vmatpush.msra.mxu0 %v1237
  %2167 = vmatpush.msra.mxu0 %v1232
  %2168 = vmatpush.msra.mxu0 %v1227
  %2169 = vmatpush.msra.mxu0 %v1222
  %2170 = vmatpush.msra.mxu0 %v1217
  %2171 = vmatpush.msra.mxu0 %v1212
  %2172 = vmatpush.msra.mxu0 %v1207
  %2173 = vmatpush.msra.mxu0 %v1202
  %2174 = vmatpush.msra.mxu0 %v1197
  %2175 = vmatpush.msra.mxu0 %v1192
  %2176 = vmatmul.f32.gmra.mxu0 %v1182
  %v2177 = vpop.f32.mrf.mxu0
  %v2178 = vadd.f32 %v1674, %v2177
  %2179 = vdwg.mxu0
  %2180 = vmatpush.msra.mxu0 %v1347
  %2181 = vmatpush.msra.mxu0 %v1342
  %2182 = vmatpush.msra.mxu0 %v1337
  %2183 = vmatpush.msra.mxu0 %v1332
  %2184 = vmatpush.msra.mxu0 %v1327
  %2185 = vmatpush.msra.mxu0 %v1322
  %2186 = vmatpush.msra.mxu0 %v1317
  %2187 = vmatpush.msra.mxu0 %v1312
  %2188 = vmatpush.msra.mxu0 %v1307
  %2189 = vmatpush.msra.mxu0 %v1302
  %2190 = vmatpush.msra.mxu0 %v1297
  %2191 = vmatpush.msra.mxu0 %v1292
  %2192 = vmatpush.msra.mxu0 %v1287
  %2193 = vmatpush.msra.mxu0 %v1282
  %2194 = vmatpush.msra.mxu0 %v1277
  %2195 = vmatpush.msra.mxu0 %v1272
  %2196 = vmatmul.f32.gmra.mxu0 %v1183
  %v2197 = vpop.f32.mrf.mxu0
  %v2198 = vadd.f32 %v2178, %v2197
  %2199 = vdwg.mxu0
  %2200 = vmatpush.msra.mxu0 %v1427
  %2201 = vmatpush.msra.mxu0 %v1422
  %2202 = vmatpush.msra.mxu0 %v1417
  %2203 = vmatpush.msra.mxu0 %v1412
  %2204 = vmatpush.msra.mxu0 %v1407
  %2205 = vmatpush.msra.mxu0 %v1402
  %2206 = vmatpush.msra.mxu0 %v1397
  %2207 = vmatpush.msra.mxu0 %v1392
  %2208 = vmatpush.msra.mxu0 %v1387
  %2209 = vmatpush.msra.mxu0 %v1382
  %2210 = vmatpush.msra.mxu0 %v1377
  %2211 = vmatpush.msra.mxu0 %v1372
  %2212 = vmatpush.msra.mxu0 %v1367
  %2213 = vmatpush.msra.mxu0 %v1362
  %2214 = vmatpush.msra.mxu0 %v1357
  %2215 = vmatpush.msra.mxu0 %v1352
  %2216 = vmatmul.f32.gmra.mxu0 %v1184
  %v2217 = vpop.f32.mrf.mxu0
  %v2218 = vadd.f32 %v2198, %v2217
  %2219 = vdwg.mxu0
  %2220 = vmatpush.msra.mxu0 %v1507
  %2221 = vmatpush.msra.mxu0 %v1502
  %2222 = vmatpush.msra.mxu0 %v1497
  %2223 = vmatpush.msra.mxu0 %v1492
  %2224 = vmatpush.msra.mxu0 %v1487
  %2225 = vmatpush.msra.mxu0 %v1482
  %2226 = vmatpush.msra.mxu0 %v1477
  %2227 = vmatpush.msra.mxu0 %v1472
  %2228 = vmatpush.msra.mxu0 %v1467
  %2229 = vmatpush.msra.mxu0 %v1462
  %2230 = vmatpush.msra.mxu0 %v1457
  %2231 = vmatpush.msra.mxu0 %v1452
  %2232 = vmatpush.msra.mxu0 %v1447
  %2233 = vmatpush.msra.mxu0 %v1442
  %2234 = vmatpush.msra.mxu0 %v1437
  %2235 = vmatpush.msra.mxu0 %v1432
  %2236 = vmatmul.f32.gmra.mxu0 %v1185
  %v2237 = vpop.f32.mrf.mxu0
  %v2238 = vadd.f32 %v2218, %v2237
  %2239 = vdwg.mxu0
  %2240 = vmatpush.msra.mxu0 %v1587
  %2241 = vmatpush.msra.mxu0 %v1582
  %2242 = vmatpush.msra.mxu0 %v1577
  %2243 = vmatpush.msra.mxu0 %v1572
  %2244 = vmatpush.msra.mxu0 %v1567
  %2245 = vmatpush.msra.mxu0 %v1562
  %2246 = vmatpush.msra.mxu0 %v1557
  %2247 = vmatpush.msra.mxu0 %v1552
  %2248 = vmatpush.msra.mxu0 %v1547
  %2249 = vmatpush.msra.mxu0 %v1542
  %2250 = vmatpush.msra.mxu0 %v1537
  %2251 = vmatpush.msra.mxu0 %v1532
  %2252 = vmatpush.msra.mxu0 %v1527
  %2253 = vmatpush.msra.mxu0 %v1522
  %2254 = vmatpush.msra.mxu0 %v1517
  %2255 = vmatpush.msra.mxu0 %v1512
  %2256 = vmatmul.f32.gmra.mxu0 %v1186
  %v2257 = vpop.f32.mrf.mxu0
  %v2258 = vadd.f32 %v2238, %v2257
  %2259 = vdwg.mxu0
  %2260 = vmatpush.msra.mxu0 %v1667
  %2261 = vmatpush.msra.mxu0 %v1662
  %2262 = vmatpush.msra.mxu0 %v1657
  %2263 = vmatpush.msra.mxu0 %v1652
  %2264 = vmatpush.msra.mxu0 %v1647
  %2265 = vmatpush.msra.mxu0 %v1642
  %2266 = vmatpush.msra.mxu0 %v1637
  %2267 = vmatpush.msra.mxu0 %v1632
  %2268 = vmatpush.msra.mxu0 %v1627
  %2269 = vmatpush.msra.mxu0 %v1622
  %2270 = vmatpush.msra.mxu0 %v1617
  %2271 = vmatpush.msra.mxu0 %v1612
  %2272 = vmatpush.msra.mxu0 %v1607
  %2273 = vmatpush.msra.mxu0 %v1602
  %2274 = vmatpush.msra.mxu0 %v1597
  %2275 = vmatpush.msra.mxu0 %v1592
  %2276 = vmatmul.f32.gmra.mxu0 %v1187
  %v2277 = vpop.f32.mrf.mxu0
  %v2278 = vadd.f32 %v2258, %v2277
  %2279 = vdwg.mxu0
  %v2280 = vmax.f32 %v1798, 0.0
  %v2281 = vmax.f32 %v1918, 0.0
  %v2282 = vmax.f32 %v2038, 0.0
  %v2283 = vmax.f32 %v2158, 0.0
  %v2284 = vmax.f32 %v2278, 0.0
  %v2285 = vld [vmem:[%s7] sm:$0xff]
  %v2286 = vld [vmem:[%s7 + $0x8] sm:$0xff]
  %v2287 = vld [vmem:[%s7 + $0x10] sm:$0xff]
  %v2288 = vld [vmem:[%s7 + $0x18] sm:$0xff]
  %v2289 = vld [vmem:[%s7 + $0x20] sm:$0xff]
  %v2290 = vld [vmem:[%s7 + $0x28] sm:$0xff]
  %v2291 = vld [vmem:[%s7 + $0x30] sm:$0xff]
  %v2292 = vld [vmem:[%s7 + $0x38] sm:$0xff]
  %v2293 = vld [vmem:[%s7 + $0x40] sm:$0xff]
  %v2294 = vld [vmem:[%s7 + $0x48] sm:$0xff]
  %v2295 = vld [vmem:[%s7 + $0x50] sm:$0xff]
  %v2296 = vld [vmem:[%s7 + $0x58] sm:$0xff]
  %v2297 = vld [vmem:[%s7 + $0x60] sm:$0xff]
  %v2298 = vld [vmem:[%s7 + $0x68] sm:$0xff]
  %v2299 = vld [vmem:[%s7 + $0x70] sm:$0xff]
  %v2300 = vld [vmem:[%s7 + $0x78] sm:$0xff]
  %v2301 = vld [vmem:[%s7 + $0x80] sm:$0xff]
  %v2302 = vld [vmem:[%s7 + $0x88] sm:$0xff]
  %v2303 = vld [vmem:[%s7 + $0x90] sm:$0xff]
  %v2304 = vld [vmem:[%s7 + $0x98] sm:$0xff]
  %v2305 = vld [vmem:[%s7 + $0xa0] sm:$0xff]
  %v2306 = vld [vmem:[%s7 + $0xa8] sm:$0xff]
  %v2307 = vld [vmem:[%s7 + $0xb0] sm:$0xff]
  %v2308 = vld [vmem:[%s7 + $0xb8] sm:$0xff]
  %v2309 = vld [vmem:[%s7 + $0xc0] sm:$0xff]
  %v2310 = vld [vmem:[%s7 + $0xc8] sm:$0xff]
  %v2311 = vld [vmem:[%s7 + $0xd0] sm:$0xff]
  %v2312 = vld [vmem:[%s7 + $0xd8] sm:$0xff]
  %v2313 = vld [vmem:[%s7 + $0xe0] sm:$0xff]
  %v2314 = vld [vmem:[%s7 + $0xe8] sm:$0xff]
  %v2315 = vld [vmem:[%s7 + $0xf0] sm:$0xff]
  %v2316 = vld [vmem:[%s7 + $0xf8] sm:$0xff]
  %v2317 = vld [vmem:[%s7 + $0x100] sm:$0xff]
  %v2318 = vld [vmem:[%s7 + $0x108] sm:$0xff]
  %v2319 = vld [vmem:[%s7 + $0x110] sm:$0xff]
  %v2320 = vld [vmem:[%s7 + $0x118] sm:$0xff]
  %v2321 = vld [vmem:[%s7 + $0x120] sm:$0xff]
  %v2322 = vld [vmem:[%s7 + $0x128] sm:$0xff]
  %v2323 = vld [vmem:[%s7 + $0x130] sm:$0xff]
  %v2324 = vld [vmem:[%s7 + $0x138] sm:$0xff]
  %v2325 = vld [vmem:[%s7 + $0x140] sm:$0xff]
  %v2326 = vld [vmem:[%s7 + $0x148] sm:$0xff]
  %v2327 = vld [vmem:[%s7 + $0x150] sm:$0xff]
  %v2328 = vld [vmem:[%s7 + $0x158] sm:$0xff]
  %v2329 = vld [vmem:[%s7 + $0x160] sm:$0xff]
  %v2330 = vld [vmem:[%s7 + $0x168] sm:$0xff]
  %v2331 = vld [vmem:[%s7 + $0x170] sm:$0xff]
  %v2332 = vld [vmem:[%s7 + $0x178] sm:$0xff]
  %v2333 = vld [vmem:[%s7 + $0x180] sm:$0xff]
  %v2334 = vld [vmem:[%s7 + $0x188] sm:$0xff]
  %v2335 = vld [vmem:[%s7 + $0x190] sm:$0xff]
  %v2336 = vld [vmem:[%s7 + $0x198] sm:$0xff]
  %v2337 = vld [vmem:[%s7 + $0x1a0] sm:$0xff]
  %v2338 = vld [vmem:[%s7 + $0x1a8] sm:$0xff]
  %v2339 = vld [vmem:[%s7 + $0x1b0] sm:$0xff]
  %v2340 = vld [vmem:[%s7 + $0x1b8] sm:$0xff]
  %v2341 = vld [vmem:[%s7 + $0x1c0] sm:$0xff]
  %v2342 = vld [vmem:[%s7 + $0x1c8] sm:$0xff]
  %v2343 = vld [vmem:[%s7 + $0x1d0] sm:$0xff]
  %v2344 = vld [vmem:[%s7 + $0x1d8] sm:$0xff]
  %v2345 = vld [vmem:[%s7 + $0x1e0] sm:$0xff]
  %v2346 = vld [vmem:[%s7 + $0x1e8] sm:$0xff]
  %v2347 = vld [vmem:[%s7 + $0x1f0] sm:$0xff]
  %v2348 = vld [vmem:[%s7 + $0x1f8] sm:$0xff]
  %v2349 = vld [vmem:[%s7 + $0x200] sm:$0xff]
  %v2350 = vld [vmem:[%s7 + $0x208] sm:$0xff]
  %v2351 = vld [vmem:[%s7 + $0x210] sm:$0xff]
  %v2352 = vld [vmem:[%s7 + $0x218] sm:$0xff]
  %v2353 = vld [vmem:[%s7 + $0x220] sm:$0xff]
  %v2354 = vld [vmem:[%s7 + $0x228] sm:$0xff]
  %v2355 = vld [vmem:[%s7 + $0x230] sm:$0xff]
  %v2356 = vld [vmem:[%s7 + $0x238] sm:$0xff]
  %v2357 = vld [vmem:[%s7 + $0x240] sm:$0xff]
  %v2358 = vld [vmem:[%s7 + $0x248] sm:$0xff]
  %v2359 = vld [vmem:[%s7 + $0x250] sm:$0xff]
  %v2360 = vld [vmem:[%s8] sm:$0x1]
  %v2362 = vperm.slane %v2360, 0
  %vm2364 = vcmask 719872
  %v2366 = vsel %vm2364, %v2284, 0
  %2368 = vmatpush.msra.mxu0 %v2300
  %2369 = vmatpush.msra.mxu0 %v2299
  %2370 = vmatpush.msra.mxu0 %v2298
  %2371 = vmatpush.msra.mxu0 %v2297
  %2372 = vmatpush.msra.mxu0 %v2296
  %2373 = vmatpush.msra.mxu0 %v2295
  %2374 = vmatpush.msra.mxu0 %v2294
  %2375 = vmatpush.msra.mxu0 %v2293
  %2376 = vmatpush.msra.mxu0 %v2292
  %2377 = vmatpush.msra.mxu0 %v2291
  %2378 = vmatpush.msra.mxu0 %v2290
  %2379 = vmatpush.msra.mxu0 %v2289
  %2380 = vmatpush.msra.mxu0 %v2288
  %2381 = vmatpush.msra.mxu0 %v2287
  %2382 = vmatpush.msra.mxu0 %v2286
  %2383 = vmatpush.msra.mxu0 %v2285
  %2384 = vmatmul.f32.gmra.mxu0 %v2280
  %v2385 = vpop.f32.mrf.mxu0
  %v2386 = vadd.f32 %v2362, %v2385
  %2387 = vdwg.mxu0
  %2388 = vmatpush.msra.mxu0 %v2316
  %2389 = vmatpush.msra.mxu0 %v2315
  %2390 = vmatpush.msra.mxu0 %v2314
  %2391 = vmatpush.msra.mxu0 %v2313
  %2392 = vmatpush.msra.mxu0 %v2312
  %2393 = vmatpush.msra.mxu0 %v2311
  %2394 = vmatpush.msra.mxu0 %v2310
  %2395 = vmatpush.msra.mxu0 %v2309
  %2396 = vmatpush.msra.mxu0 %v2308
  %2397 = vmatpush.msra.mxu0 %v2307
  %2398 = vmatpush.msra.mxu0 %v2306
  %2399 = vmatpush.msra.mxu0 %v2305
  %2400 = vmatpush.msra.mxu0 %v2304
  %2401 = vmatpush.msra.mxu0 %v2303
  %2402 = vmatpush.msra.mxu0 %v2302
  %2403 = vmatpush.msra.mxu0 %v2301
  %2404 = vmatmul.f32.gmra.mxu0 %v2281
  %v2405 = vpop.f32.mrf.mxu0
  %v2406 = vadd.f32 %v2386, %v2405
  %2407 = vdwg.mxu0
  %2408 = vmatpush.msra.mxu0 %v2332
  %2409 = vmatpush.msra.mxu0 %v2331
  %2410 = vmatpush.msra.mxu0 %v2330
  %2411 = vmatpush.msra.mxu0 %v2329
  %2412 = vmatpush.msra.mxu0 %v2328
  %2413 = vmatpush.msra.mxu0 %v2327
  %2414 = vmatpush.msra.mxu0 %v2326
  %2415 = vmatpush.msra.mxu0 %v2325
  %2416 = vmatpush.msra.mxu0 %v2324
  %2417 = vmatpush.msra.mxu0 %v2323
  %2418 = vmatpush.msra.mxu0 %v2322
  %2419 = vmatpush.msra.mxu0 %v2321
  %2420 = vmatpush.msra.mxu0 %v2320
  %2421 = vmatpush.msra.mxu0 %v2319
  %2422 = vmatpush.msra.mxu0 %v2318
  %2423 = vmatpush.msra.mxu0 %v2317
  %2424 = vmatmul.f32.gmra.mxu0 %v2282
  %v2425 = vpop.f32.mrf.mxu0
  %v2426 = vadd.f32 %v2406, %v2425
  %2427 = vdwg.mxu0
  %2428 = vmatpush.msra.mxu0 %v2348
  %2429 = vmatpush.msra.mxu0 %v2347
  %2430 = vmatpush.msra.mxu0 %v2346
  %2431 = vmatpush.msra.mxu0 %v2345
  %2432 = vmatpush.msra.mxu0 %v2344
  %2433 = vmatpush.msra.mxu0 %v2343
  %2434 = vmatpush.msra.mxu0 %v2342
  %2435 = vmatpush.msra.mxu0 %v2341
  %2436 = vmatpush.msra.mxu0 %v2340
  %2437 = vmatpush.msra.mxu0 %v2339
  %2438 = vmatpush.msra.mxu0 %v2338
  %2439 = vmatpush.msra.mxu0 %v2337
  %2440 = vmatpush.msra.mxu0 %v2336
  %2441 = vmatpush.msra.mxu0 %v2335
  %2442 = vmatpush.msra.mxu0 %v2334
  %2443 = vmatpush.msra.mxu0 %v2333
  %2444 = vmatmul.f32.gmra.mxu0 %v2283
  %v2445 = vpop.f32.mrf.mxu0
  %v2446 = vadd.f32 %v2426, %v2445
  %2447 = vdwg.mxu0
  %2448 = vmatpush.msra.mxu0 0.0
  %2449 = vmatpush.msra.mxu0 0.0
  %2450 = vmatpush.msra.mxu0 0.0
  %2451 = vmatpush.msra.mxu0 0.0
  %2452 = vmatpush.msra.mxu0 0.0
  %2453 = vmatpush.msra.mxu0 %v2359
  %2454 = vmatpush.msra.mxu0 %v2358
  %2455 = vmatpush.msra.mxu0 %v2357
  %2456 = vmatpush.msra.mxu0 %v2356
  %2457 = vmatpush.msra.mxu0 %v2355
  %2458 = vmatpush.msra.mxu0 %v2354
  %2459 = vmatpush.msra.mxu0 %v2353
  %2460 = vmatpush.msra.mxu0 %v2352
  %2461 = vmatpush.msra.mxu0 %v2351
  %2462 = vmatpush.msra.mxu0 %v2350
  %2463 = vmatpush.msra.mxu0 %v2349
  %2464 = vmatmul.f32.gmra.mxu0 %v2366
  %v2465 = vpop.f32.mrf.mxu0
  %v2466 = vadd.f32 %v2446, %v2465
  %2467 = vdwg.mxu0
  %v2468 = vmax.f32 %v2466, 0.0
  %v2469 = vld [vmem:[%s9] sm:$0xff]
  %v2470 = vld [vmem:[%s9 + $0x8] sm:$0xff]
  %v2471 = vld [vmem:[%s9 + $0x10] sm:$0xff]
  %v2472 = vld [vmem:[%s9 + $0x18] sm:$0xff]
  %v2473 = vld [vmem:[%s9 + $0x20] sm:$0xff]
  %v2474 = vld [vmem:[%s9 + $0x28] sm:$0xff]
  %v2475 = vld [vmem:[%s9 + $0x30] sm:$0xff]
  %v2476 = vld [vmem:[%s9 + $0x38] sm:$0xff]
  %v2477 = vld [vmem:[%s9 + $0x40] sm:$0xff]
  %v2478 = vld [vmem:[%s9 + $0x48] sm:$0xff]
  %v2479 = vld [vmem:[%s9 + $0x50] sm:$0xff]
  %v2480 = vld [vmem:[%s9 + $0x58] sm:$0xff]
  %v2481 = vld [vmem:[%s9 + $0x60] sm:$0xff]
  %v2482 = vld [vmem:[%s9 + $0x68] sm:$0xff]
  %v2483 = vld [vmem:[%s9 + $0x70] sm:$0xff]
  %v2484 = vld [vmem:[%s9 + $0x78] sm:$0xff]
  %v2485 = vld [vmem:[%s10] sm:$0x1]
  %v2487 = vperm.slane %v2485, 0
  %2489 = vmatpush.msra.mxu0 %v2484
  %2490 = vmatpush.msra.mxu0 %v2483
  %2491 = vmatpush.msra.mxu0 %v2482
  %2492 = vmatpush.msra.mxu0 %v2481
  %2493 = vmatpush.msra.mxu0 %v2480
  %2494 = vmatpush.msra.mxu0 %v2479
  %2495 = vmatpush.msra.mxu0 %v2478
  %2496 = vmatpush.msra.mxu0 %v2477
  %2497 = vmatpush.msra.mxu0 %v2476
  %2498 = vmatpush.msra.mxu0 %v2475
  %2499 = vmatpush.msra.mxu0 %v2474
  %2500 = vmatpush.msra.mxu0 %v2473
  %2501 = vmatpush.msra.mxu0 %v2472
  %2502 = vmatpush.msra.mxu0 %v2471
  %2503 = vmatpush.msra.mxu0 %v2470
  %2504 = vmatpush.msra.mxu0 %v2469
  %2505 = vmatmul.f32.gmra.mxu0 %v2468
  %v2506 = vpop.f32.mrf.mxu0
  %v2507 = vadd.f32 %v2487, %v2506
  %2508 = vdwg.mxu0
  %2509 = vmax.xlane.f32.xlu0 %v2507
  %v2510 = vpop.xlane.xlu0 %2509
  %v2511 = vsub.f32 %v2507, %v2510
  %v2512 = vmul.f32 %v2511, 1.442695
  %v2513 = vpow.pop %v2512
  %2514 = vadd.xlane.f32.xlu0 %v2513
  %v2515 = vpop.xlane.xlu0 %2514
  %v2516 = vlog2.pop %v2515
  %v2517 = vmul.f32 %v2516, 0.6931472
  %v2518 = vsub.f32 %v2511, %v2517
  %2519 = vst [vmem:[%s11] sm:$0xff] %v2518
  // Predicated region
  $region46: #{cnn_forward.1} parent=0 // pred_check
    _
  $region47: #{cnn_forward.1} parent=0 // pred_check_branch
    %2521 = sbr.rel (0) target = $region49
  $region48: #{cnn_forward.1} parent=0 // pred_region
    _
  $region49: #{cnn_forward.1} parent=0 // pred_fallthru
    _
  // Predicated region
  $region50: #{cnn_forward.1} parent=0 // pred_check
    _
  $region51: #{cnn_forward.1} parent=0 // pred_check_branch
    %2523 = sbr.rel (0) target = $region53
  $region52: #{cnn_forward.1} parent=0 // pred_region
    _
  $region53: #{cnn_forward.1} parent=0 // pred_fallthru
    _

</llo_original>
